<compile_context>
chip_gen: v7x
topology: tpu7x:2x2x1
jax: 0.10.0
libtpu: 0.0.40
codegen_flags: <defaults>
</compile_context>

<pallas_src>
from functools import partial

import jax
import jax.numpy as jnp
from jax.experimental import pallas as pl
from jax.experimental.pallas import tpu as pltpu

HID = 64                       # hidden width of both GCNConv layers
VMEM_LIMIT = 48 * 1024 * 1024  # safe on v5e/v6e (128 MiB) and v7x (64 MiB) per TC


def _round_up(x, m):
    return (x + m - 1) // m * m


def _pick_tiles(n):
    """Adjacency tile (tn == tk) and padded node count. Bigger tiles for big N,
    but always >= 2 output-column blocks so both v7x TensorCores get work."""
    n128 = _round_up(max(n, 128), 128)
    if n128 >= 1024:
        tile = 512
    elif n128 >= 512:
        tile = 256
    else:
        tile = 128
    n_pad = _round_up(n128, tile)
    return tile, tile, n_pad


# --------------------------- fused layer-1 kernel ------------------------------
def _layer1(w1t, xt, a_pad, b1c, w2t, tn, tk):
    """t2^T = W2^T relu( (W1^T X^T) A + b1^T )  -- grid (out cols j, contraction k)."""
    hid, f = w1t.shape
    n = xt.shape[1]

    def kernel(w1t_ref, xt_ref, a_ref, b_ref, w2t_ref, o_ref, acc_ref):
        k = pl.program_id(1)

        @pl.when(k == 0)
        def _():
            acc_ref[...] = jnp.zeros_like(acc_ref)

        kk = pl.multiple_of(k * tk, tk)
        # on-the-fly feature transform of the k-th node block (X^T resident in VMEM)
        t_blk = jnp.dot(w1t_ref[...], xt_ref[:, pl.ds(kk, tk)],
                        preferred_element_type=jnp.float32).astype(jnp.bfloat16)
        acc_ref[...] += jnp.dot(t_blk, a_ref[...],
                                preferred_element_type=jnp.float32)

        @pl.when(k == pl.num_programs(1) - 1)
        def _():
            # bias + relu + layer-2 feature transform, only in the finalize branch
            h1 = jnp.maximum(acc_ref[...] + b_ref[...], 0.0).astype(jnp.bfloat16)
            o_ref[...] = jnp.dot(w2t_ref[...], h1,
                                 preferred_element_type=jnp.float32
                                 ).astype(o_ref.dtype)

    return pl.pallas_call(
        kernel,
        out_shape=jax.ShapeDtypeStruct((hid, n), jnp.bfloat16),
        grid_spec=pltpu.PrefetchScalarGridSpec(
            num_scalar_prefetch=0,
            grid=(n // tn, n // tk),
            in_specs=[
                pl.BlockSpec((hid, f), lambda j, k: (0, 0)),     # W1^T resident
                pl.BlockSpec((f, n), lambda j, k: (0, 0)),       # X^T resident (full width)
                pl.BlockSpec((tk, tn), lambda j, k: (k, j)),     # A streamed, bf16
                pl.BlockSpec((hid, 1), lambda j, k: (0, 0)),     # b1 column
                pl.BlockSpec((hid, hid), lambda j, k: (0, 0)),   # W2^T resident
            ],
            out_specs=pl.BlockSpec((hid, tn), lambda j, k: (0, j)),
            scratch_shapes=[pltpu.VMEM((hid, tn), jnp.float32)]),
        compiler_params=pltpu.CompilerParams(
            dimension_semantics=("parallel", "arbitrary"),
            vmem_limit_bytes=VMEM_LIMIT),
    )(w1t, xt, a_pad, b1c, w2t)


# --------------------------- fused layer-2 kernel ------------------------------
def _layer2(t2, a_pad, b2c, wl_row, tn, tk):
    """s^T = wl^T relu( t2 A + b2^T )   -> (1, N)."""
    hid, n = t2.shape

    def kernel(t2_ref, a_ref, b_ref, wl_ref, s_ref, acc_ref):
        k = pl.program_id(1)

        @pl.when(k == 0)
        def _():
            acc_ref[...] = jnp.zeros_like(acc_ref)

        kk = pl.multiple_of(k * tk, tk)
        acc_ref[...] += jnp.dot(t2_ref[:, pl.ds(kk, tk)], a_ref[...],
                                preferred_element_type=jnp.float32)

        @pl.when(k == pl.num_programs(1) - 1)
        def _():
            h2 = jnp.maximum(acc_ref[...] + b_ref[...], 0.0).astype(jnp.bfloat16)
            # readout projection fused here: (1,HID)bf16 x (HID,TN)bf16 -> f32
            s_ref[...] = jnp.dot(wl_ref[...], h2,
                                 preferred_element_type=jnp.float32)

    return pl.pallas_call(
        kernel,
        out_shape=jax.ShapeDtypeStruct((1, n), jnp.float32),
        grid_spec=pltpu.PrefetchScalarGridSpec(
            num_scalar_prefetch=0,
            grid=(n // tn, n // tk),
            in_specs=[
                pl.BlockSpec((hid, n), lambda j, k: (0, 0)),     # t2 resident (full width)
                pl.BlockSpec((tk, tn), lambda j, k: (k, j)),     # A streamed, bf16
                pl.BlockSpec((hid, 1), lambda j, k: (0, 0)),     # b2 column
                pl.BlockSpec((1, hid), lambda j, k: (0, 0)),     # wl^T row, bf16
            ],
            out_specs=pl.BlockSpec((1, tn), lambda j, k: (0, j)),
            scratch_shapes=[pltpu.VMEM((hid, tn), jnp.float32)]),
        compiler_params=pltpu.CompilerParams(
            dimension_semantics=("parallel", "arbitrary"),
            vmem_limit_bytes=VMEM_LIMIT),
    )(t2, a_pad, b2c, wl_row)


# ------------------------------- readout kernel --------------------------------
def _readout(s, poolT, bl2, tk):
    """y^T = sigmoid(s^T P^T + bl) -- tiled over N with an f32 accumulator."""
    n = s.shape[1]
    g = poolT.shape[1]

    def kernel(s_ref, p_ref, bl_ref, o_ref, acc_ref):
        k = pl.program_id(0)

        @pl.when(k == 0)
        def _():
            acc_ref[...] = jnp.zeros_like(acc_ref)

        acc_ref[...] += jnp.dot(s_ref[...], p_ref[...],
                                preferred_element_type=jnp.float32)

        @pl.when(k == pl.num_programs(0) - 1)
        def _():
            o_ref[...] = jax.nn.sigmoid(acc_ref[...] + bl_ref[...])

    return pl.pallas_call(
        kernel,
        out_shape=jax.ShapeDtypeStruct((1, g), jnp.float32),
        grid_spec=pltpu.PrefetchScalarGridSpec(
            num_scalar_prefetch=0,
            grid=(n // tk,),
            in_specs=[
                pl.BlockSpec((1, tk), lambda k: (0, k)),
                pl.BlockSpec((tk, g), lambda k: (k, 0)),
                pl.BlockSpec((1, 1), lambda k: (0, 0)),
            ],
            out_specs=pl.BlockSpec((1, g), lambda k: (0, 0)),
            scratch_shapes=[pltpu.VMEM((1, g), jnp.float32)]),
        compiler_params=pltpu.CompilerParams(
            dimension_semantics=("arbitrary",)),
    )(s, poolT, bl2)


# -------------------------------- forward pass ----------------------------------
@partial(jax.jit, static_argnames=("tn", "tk"))
def gcn_forward(a_pad, xt_pad, poolT_pad, w1, b1, w2, b2, wl, bl, *, tn, tk):
    """a_pad: (Np,Np) bf16 symmetric normalized adjacency (zero padding);
       xt_pad: (F,Np) bf16; poolT_pad: (Np,G) f32 with zero padded rows."""
    w1t = w1.T.astype(jnp.bfloat16)                   # (HID, F_in)
    w2t = w2.T.astype(jnp.bfloat16)                   # (HID, HID)
    b1c = b1.reshape(-1, 1).astype(jnp.float32)       # (HID, 1)
    b2c = b2.reshape(-1, 1).astype(jnp.float32)
    wl_row = wl.T.astype(jnp.bfloat16)                # (1, HID) bf16 (no f32 up-cast)
    bl2 = bl.reshape(1, 1).astype(jnp.float32)

    t2 = _layer1(w1t, xt_pad, a_pad, b1c, w2t, tn, tk)   # (HID,N) = (relu(AXW1+b1) W2)^T
    s = _layer2(t2, a_pad, b2c, wl_row, tn, tk)          # (1,N)   = (H2 wl)^T
    y = _readout(s, poolT_pad, bl2, tk)                  # (1,G)   = sigmoid(P H2 wl + bl)^T
    return y.reshape(-1, 1)                              # (G, 1)


# ------------------------------ JAX preprocessing --------------------------------
# TODO(synk): the edge_index -> dense normalized adjacency scatter and the one-hot
# mean-pool matrix construction stay in plain JAX; dynamic scatter has no clean
# Pallas equivalent here.
def build_norm_adj(edge_index, num_nodes):
    """A_hat = D^{-1/2} (A + I) D^{-1/2} (torch_geometric GCNConv normalization)."""
    src, dst = edge_index[0], edge_index[1]
    a = jnp.zeros((num_nodes, num_nodes), jnp.float32).at[src, dst].set(1.0)
    a = a + jnp.eye(num_nodes, dtype=jnp.float32)     # add self loops
    deg = a.sum(axis=1)
    d_inv_sqrt = jnp.where(deg > 0, 1.0 / jnp.sqrt(deg), 0.0)
    return d_inv_sqrt[:, None] * a * d_inv_sqrt[None, :]


def build_pool_matrix(batch, num_graphs):
    """P[g, i] = 1/|nodes in graph g| if batch[i] == g else 0."""
    one_hot = jax.nn.one_hot(batch, num_graphs, dtype=jnp.float32)   # (N, G)
    counts = jnp.maximum(one_hot.sum(axis=0), 1.0)
    return one_hot.T / counts[:, None]


# --------------------------------- example run -----------------------------------
if __name__ == "__main__":
    G = 4              # graphs in the batch
    NODES_PER_G = 64
    N = G * NODES_PER_G
    F_IN = 16          # num_node_features

    key = jax.random.PRNGKey(0)
    kx, k1, kb1, k2, kb2, kl, kbl = jax.random.split(key, 7)

    x = jax.random.normal(kx, (N, F_IN), dtype=jnp.float32)

    # ring graph inside each component (symmetric edges)
    src, dst = [], []
    for gi in range(G):
        base = gi * NODES_PER_G
        for i in range(NODES_PER_G):
            a, b = base + i, base + (i + 1) % NODES_PER_G
            src += [a, b]
            dst += [b, a]
    edge_index = jnp.array([src, dst], dtype=jnp.int32)
    batch = jnp.repeat(jnp.arange(G, dtype=jnp.int32), NODES_PER_G)

    # parameters (GCNConv weight is (in, out) so conv = A_hat @ X @ W + b)
    w1 = jax.random.normal(k1, (F_IN, HID), dtype=jnp.float32) / jnp.sqrt(F_IN)
    b1 = jax.random.normal(kb1, (1, HID), dtype=jnp.float32) * 0.01
    w2 = jax.random.normal(k2, (HID, HID), dtype=jnp.float32) / jnp.sqrt(HID)
    b2 = jax.random.normal(kb2, (1, HID), dtype=jnp.float32) * 0.01
    wl = jax.random.normal(kl, (HID, 1), dtype=jnp.float32) / jnp.sqrt(HID)
    bl = jax.random.normal(kbl, (1, 1), dtype=jnp.float32) * 0.01

    tn, tk, n_pad = _pick_tiles(N)

    a_hat = build_norm_adj(edge_index, N)              # (N, N) f32, symmetric
    pool = build_pool_matrix(batch, G)                 # (G, N)

    # one-time padded / bf16 materialization outside the jitted forward
    a_pad = jnp.zeros((n_pad, n_pad), jnp.bfloat16).at[:N, :N].set(
        a_hat.astype(jnp.bfloat16))
    xt_pad = jnp.zeros((F_IN, n_pad), jnp.bfloat16).at[:, :N].set(
        x.T.astype(jnp.bfloat16))
    poolT_pad = jnp.zeros((n_pad, G), jnp.float32).at[:N, :].set(pool.T)

    out = gcn_forward(a_pad, xt_pad, poolT_pad, w1, b1, w2, b2, wl, bl,
                      tn=tn, tk=tk)
    jax.block_until_ready(out)

    # pure-JAX reference with the same bf16 quantization the kernels use
    # (vs a pure f32 PyTorch GCN expect ~1e-3 level drift; f32 accumulation kept)
    f32, bf16 = jnp.float32, jnp.bfloat16
    a_r = a_hat.astype(bf16).astype(f32)
    x_r = x.astype(bf16).astype(f32)
    w1_r = w1.astype(bf16).astype(f32)
    w2_r = w2.astype(bf16).astype(f32)
    wl_r = wl.astype(bf16).astype(f32)
    t1 = (x_r @ w1_r).astype(bf16).astype(f32)
    h1 = jnp.maximum(a_r @ t1 + b1, 0.0).astype(bf16).astype(f32)
    t2 = (h1 @ w2_r).astype(bf16).astype(f32)
    h2 = jnp.maximum(a_r @ t2 + b2, 0.0).astype(bf16).astype(f32)
    ref = jax.nn.sigmoid(pool @ (h2 @ wl_r) + bl)      # (G, 1)

    assert out.shape == (G, 1), out.shape
    assert jnp.allclose(out, ref, atol=2e-3), (out, ref)

    print("KERNEL_OK")
</pallas_src>

<mosaic_0001>
module attributes {stable_mosaic.version = 11 : i64} {
  func.func @kernel(%arg0: i32, %arg1: i32, %arg2: memref<64x16xbf16, #tpu.memory_space<vmem>>, %arg3: memref<16x256xbf16, #tpu.memory_space<vmem>>, %arg4: memref<128x128xbf16, #tpu.memory_space<vmem>>, %arg5: memref<64x1xf32, #tpu.memory_space<vmem>>, %arg6: memref<64x64xbf16, #tpu.memory_space<vmem>>, %arg7: memref<64x128xbf16, #tpu.memory_space<vmem>>, %arg8: memref<64x128xf32, #tpu.memory_space<vmem>>) attributes {dimension_semantics = [#tpu.dimension_semantics<parallel>, #tpu.dimension_semantics<arbitrary>], iteration_bounds = array<i64: 2, 2>, scalar_prefetch = 0 : i64, scratch_operands = 1 : i64, tpu.core_type = #tpu.core_type<tc>, window_params = [{pipeline_mode = #tpu.pipeline_mode<synchronous>, transform_indices = @transform_0, window_bounds = array<i64: 64, 16>}, {pipeline_mode = #tpu.pipeline_mode<synchronous>, transform_indices = @transform_1, window_bounds = array<i64: 16, 256>}, {transform_indices = @transform_2, window_bounds = array<i64: 128, 128>}, {pipeline_mode = #tpu.pipeline_mode<synchronous>, transform_indices = @transform_3, window_bounds = array<i64: 64, 1>}, {pipeline_mode = #tpu.pipeline_mode<synchronous>, transform_indices = @transform_4, window_bounds = array<i64: 64, 64>}, {transform_indices = @transform_5, window_bounds = array<i64: 64, 128>}]} {
    %c0_i32 = arith.constant 0 : i32
    %0 = arith.cmpi eq, %arg1, %c0_i32 : i32
    %1 = arith.extui %0 : i1 to i32
    %c0_i32_0 = arith.constant 0 : i32
    %2 = arith.cmpi ne, %1, %c0_i32_0 : i32
    scf.if %2 {
      %cst_11 = arith.constant 0.000000e+00 : f32
      %18 = vector.broadcast %cst_11 : f32 to vector<64x128xf32>
      %c0_12 = arith.constant 0 : index
      %c0_13 = arith.constant 0 : index
      %19 = vector.load %arg8[%c0_12, %c0_13] : memref<64x128xf32, #tpu.memory_space<vmem>>, vector<64x128xf32>
      tpu.vector_store %arg8[%c0_12, %c0_13], %18 {strides = array<i32>} : memref<64x128xf32, #tpu.memory_space<vmem>>, vector<64x128xf32>,
    } else {
    }
    %c128_i32 = arith.constant 128 : i32
    %3 = arith.muli %arg1, %c128_i32 : i32
    %4 = tpu.assume_multiple %3, 128 : i32
    %c0 = arith.constant 0 : index
    %c0_1 = arith.constant 0 : index
    %5 = vector.load %arg2[%c0, %c0_1] : memref<64x16xbf16, #tpu.memory_space<vmem>>, vector<64x16xbf16>
    %c0_2 = arith.constant 0 : index
    %6 = arith.index_cast %4 : i32 to index
    %7 = vector.load %arg3[%c0_2, %6] : memref<16x256xbf16, #tpu.memory_space<vmem>>, vector<16x128xbf16>
    %cst = arith.constant dense<0.000000e+00> : vector<64x128xf32>
    %8 = tpu.matmul %5, %7, %cst {dimension_numbers = #tpu.dot_dimension_numbers<[1], [0], [0], [1], [0, 0, 1, 1], [], []>} : vector<64x16xbf16>, vector<16x128xbf16>, vector<64x128xf32> -> vector<64x128xf32>
    %9 = arith.truncf %8 : vector<64x128xf32> to vector<64x128xbf16>
    %c0_3 = arith.constant 0 : index
    %c0_4 = arith.constant 0 : index
    %10 = vector.load %arg8[%c0_3, %c0_4] : memref<64x128xf32, #tpu.memory_space<vmem>>, vector<64x128xf32>
    %c0_5 = arith.constant 0 : index
    %c0_6 = arith.constant 0 : index
    %11 = vector.load %arg4[%c0_5, %c0_6] : memref<128x128xbf16, #tpu.memory_space<vmem>>, vector<128x128xbf16>
    %cst_7 = arith.constant dense<0.000000e+00> : vector<64x128xf32>
    %12 = tpu.matmul %9, %11, %cst_7 {dimension_numbers = #tpu.dot_dimension_numbers<[1], [0], [0], [1], [0, 0, 1, 1], [], []>} : vector<64x128xbf16>, vector<128x128xbf16>, vector<64x128xf32> -> vector<64x128xf32>
    %13 = arith.addf %10, %12 : vector<64x128xf32>
    %c0_8 = arith.constant 0 : index
    %c0_9 = arith.constant 0 : index
    %14 = vector.load %arg8[%c0_8, %c0_9] : memref<64x128xf32, #tpu.memory_space<vmem>>, vector<64x128xf32>
    tpu.vector_store %arg8[%c0_8, %c0_9], %13 {strides = array<i32>} : memref<64x128xf32, #tpu.memory_space<vmem>>, vector<64x128xf32>,
    %c1_i32 = arith.constant 1 : i32
    %15 = arith.cmpi eq, %arg1, %c1_i32 : i32
    %16 = arith.extui %15 : i1 to i32
    %c0_i32_10 = arith.constant 0 : i32
    %17 = arith.cmpi ne, %16, %c0_i32_10 : i32
    scf.if %17 {
      %c0_11 = arith.constant 0 : index
      %c0_12 = arith.constant 0 : index
      %18 = vector.load %arg8[%c0_11, %c0_12] : memref<64x128xf32, #tpu.memory_space<vmem>>, vector<64x128xf32>
      %c0_13 = arith.constant 0 : index
      %c0_14 = arith.constant 0 : index
      %19 = vector.load %arg5[%c0_13, %c0_14] : memref<64x1xf32, #tpu.memory_space<vmem>>, vector<64x1xf32>
      %20 = vector.broadcast %19 : vector<64x1xf32> to vector<64x128xf32>
      %21 = arith.addf %18, %20 : vector<64x128xf32>
      %cst_15 = arith.constant 0.000000e+00 : f32
      %22 = vector.broadcast %cst_15 : f32 to vector<64x128xf32>
      %23 = arith.maximumf %21, %22 : vector<64x128xf32>
      %24 = arith.truncf %23 : vector<64x128xf32> to vector<64x128xbf16>
      %c0_16 = arith.constant 0 : index
      %c0_17 = arith.constant 0 : index
      %25 = vector.load %arg6[%c0_16, %c0_17] : memref<64x64xbf16, #tpu.memory_space<vmem>>, vector<64x64xbf16>
      %cst_18 = arith.constant dense<0.000000e+00> : vector<64x128xf32>
      %26 = tpu.matmul %25, %24, %cst_18 {dimension_numbers = #tpu.dot_dimension_numbers<[1], [0], [0], [1], [0, 0, 1, 1], [], []>} : vector<64x64xbf16>, vector<64x128xbf16>, vector<64x128xf32> -> vector<64x128xf32>
      %27 = arith.truncf %26 : vector<64x128xf32> to vector<64x128xbf16>
      %c0_19 = arith.constant 0 : index
      %c0_20 = arith.constant 0 : index
      %28 = vector.load %arg7[%c0_19, %c0_20] : memref<64x128xbf16, #tpu.memory_space<vmem>>, vector<64x128xbf16>
      tpu.vector_store %arg7[%c0_19, %c0_20], %27 {strides = array<i32>} : memref<64x128xbf16, #tpu.memory_space<vmem>>, vector<64x128xbf16>,
    } else {
    }
    return
  }
  func.func @transform_0(%arg0: i32, %arg1: i32) -> (i32, i32) {
    %c0_i32 = arith.constant 0 : i32
    %c0_i32_0 = arith.constant 0 : i32
    %c0_i32_1 = arith.constant 0 : i32
    return %c0_i32, %c0_i32_0 : i32, i32
  }
  func.func @transform_1(%arg0: i32, %arg1: i32) -> (i32, i32) {
    %c0_i32 = arith.constant 0 : i32
    %c0_i32_0 = arith.constant 0 : i32
    %c0_i32_1 = arith.constant 0 : i32
    return %c0_i32, %c0_i32_0 : i32, i32
  }
  func.func @transform_2(%arg0: i32, %arg1: i32) -> (i32, i32) {
    %c0_i32 = arith.constant 0 : i32
    return %arg1, %arg0 : i32, i32
  }
  func.func @transform_3(%arg0: i32, %arg1: i32) -> (i32, i32) {
    %c0_i32 = arith.constant 0 : i32
    %c0_i32_0 = arith.constant 0 : i32
    %c0_i32_1 = arith.constant 0 : i32
    return %c0_i32, %c0_i32_0 : i32, i32
  }
  func.func @transform_4(%arg0: i32, %arg1: i32) -> (i32, i32) {
    %c0_i32 = arith.constant 0 : i32
    %c0_i32_0 = arith.constant 0 : i32
    %c0_i32_1 = arith.constant 0 : i32
    return %c0_i32, %c0_i32_0 : i32, i32
  }
  func.func @transform_5(%arg0: i32, %arg1: i32) -> (i32, i32) {
    %c0_i32 = arith.constant 0 : i32
    %c0_i32_0 = arith.constant 0 : i32
    return %c0_i32, %arg0 : i32, i32
  }
}

module attributes {stable_mosaic.version = 11 : i64} {
  func.func @kernel(%arg0: i32, %arg1: i32, %arg2: memref<64x256xbf16, #tpu.memory_space<vmem>>, %arg3: memref<128x128xbf16, #tpu.memory_space<vmem>>, %arg4: memref<64x1xf32, #tpu.memory_space<vmem>>, %arg5: memref<1x64xbf16, #tpu.memory_space<vmem>>, %arg6: memref<1x128xf32, #tpu.memory_space<vmem>>, %arg7: memref<64x128xf32, #tpu.memory_space<vmem>>) attributes {dimension_semantics = [#tpu.dimension_semantics<parallel>, #tpu.dimension_semantics<arbitrary>], iteration_bounds = array<i64: 2, 2>, scalar_prefetch = 0 : i64, scratch_operands = 1 : i64, tpu.core_type = #tpu.core_type<tc>, window_params = [{pipeline_mode = #tpu.pipeline_mode<synchronous>, transform_indices = @transform_0, window_bounds = array<i64: 64, 256>}, {transform_indices = @transform_1, window_bounds = array<i64: 128, 128>}, {pipeline_mode = #tpu.pipeline_mode<synchronous>, transform_indices = @transform_2, window_bounds = array<i64: 64, 1>}, {pipeline_mode = #tpu.pipeline_mode<synchronous>, transform_indices = @transform_3, window_bounds = array<i64: 1, 64>}, {transform_indices = @transform_4, window_bounds = array<i64: 1, 128>}]} {
    %c0_i32 = arith.constant 0 : i32
    %0 = arith.cmpi eq, %arg1, %c0_i32 : i32
    %1 = arith.extui %0 : i1 to i32
    %c0_i32_0 = arith.constant 0 : i32
    %2 = arith.cmpi ne, %1, %c0_i32_0 : i32
    scf.if %2 {
      %cst_8 = arith.constant 0.000000e+00 : f32
      %15 = vector.broadcast %cst_8 : f32 to vector<64x128xf32>
      %c0_9 = arith.constant 0 : index
      %c0_10 = arith.constant 0 : index
      %16 = vector.load %arg7[%c0_9, %c0_10] : memref<64x128xf32, #tpu.memory_space<vmem>>, vector<64x128xf32>
      tpu.vector_store %arg7[%c0_9, %c0_10], %15 {strides = array<i32>} : memref<64x128xf32, #tpu.memory_space<vmem>>, vector<64x128xf32>,
    } else {
    }
    %c128_i32 = arith.constant 128 : i32
    %3 = arith.muli %arg1, %c128_i32 : i32
    %4 = tpu.assume_multiple %3, 128 : i32
    %c0 = arith.constant 0 : index
    %c0_1 = arith.constant 0 : index
    %5 = vector.load %arg7[%c0, %c0_1] : memref<64x128xf32, #tpu.memory_space<vmem>>, vector<64x128xf32>
    %c0_2 = arith.constant 0 : index
    %6 = arith.index_cast %4 : i32 to index
    %7 = vector.load %arg2[%c0_2, %6] : memref<64x256xbf16, #tpu.memory_space<vmem>>, vector<64x128xbf16>
    %c0_3 = arith.constant 0 : index
    %c0_4 = arith.constant 0 : index
    %8 = vector.load %arg3[%c0_3, %c0_4] : memref<128x128xbf16, #tpu.memory_space<vmem>>, vector<128x128xbf16>
    %cst = arith.constant dense<0.000000e+00> : vector<64x128xf32>
    %9 = tpu.matmul %7, %8, %cst {dimension_numbers = #tpu.dot_dimension_numbers<[1], [0], [0], [1], [0, 0, 1, 1], [], []>} : vector<64x128xbf16>, vector<128x128xbf16>, vector<64x128xf32> -> vector<64x128xf32>
    %10 = arith.addf %5, %9 : vector<64x128xf32>
    %c0_5 = arith.constant 0 : index
    %c0_6 = arith.constant 0 : index
    %11 = vector.load %arg7[%c0_5, %c0_6] : memref<64x128xf32, #tpu.memory_space<vmem>>, vector<64x128xf32>
    tpu.vector_store %arg7[%c0_5, %c0_6], %10 {strides = array<i32>} : memref<64x128xf32, #tpu.memory_space<vmem>>, vector<64x128xf32>,
    %c1_i32 = arith.constant 1 : i32
    %12 = arith.cmpi eq, %arg1, %c1_i32 : i32
    %13 = arith.extui %12 : i1 to i32
    %c0_i32_7 = arith.constant 0 : i32
    %14 = arith.cmpi ne, %13, %c0_i32_7 : i32
    scf.if %14 {
      %c0_8 = arith.constant 0 : index
      %c0_9 = arith.constant 0 : index
      %15 = vector.load %arg7[%c0_8, %c0_9] : memref<64x128xf32, #tpu.memory_space<vmem>>, vector<64x128xf32>
      %c0_10 = arith.constant 0 : index
      %c0_11 = arith.constant 0 : index
      %16 = vector.load %arg4[%c0_10, %c0_11] : memref<64x1xf32, #tpu.memory_space<vmem>>, vector<64x1xf32>
      %17 = vector.broadcast %16 : vector<64x1xf32> to vector<64x128xf32>
      %18 = arith.addf %15, %17 : vector<64x128xf32>
      %cst_12 = arith.constant 0.000000e+00 : f32
      %19 = vector.broadcast %cst_12 : f32 to vector<64x128xf32>
      %20 = arith.maximumf %18, %19 : vector<64x128xf32>
      %21 = arith.truncf %20 : vector<64x128xf32> to vector<64x128xbf16>
      %c0_13 = arith.constant 0 : index
      %c0_14 = arith.constant 0 : index
      %22 = vector.load %arg5[%c0_13, %c0_14] : memref<1x64xbf16, #tpu.memory_space<vmem>>, vector<1x64xbf16>
      %cst_15 = arith.constant dense<0.000000e+00> : vector<1x128xf32>
      %23 = tpu.matmul %22, %21, %cst_15 {dimension_numbers = #tpu.dot_dimension_numbers<[1], [0], [0], [1], [0, 0, 1, 1], [], []>} : vector<1x64xbf16>, vector<64x128xbf16>, vector<1x128xf32> -> vector<1x128xf32>
      %c0_16 = arith.constant 0 : index
      %c0_17 = arith.constant 0 : index
      %24 = vector.load %arg6[%c0_16, %c0_17] : memref<1x128xf32, #tpu.memory_space<vmem>>, vector<1x128xf32>
      tpu.vector_store %arg6[%c0_16, %c0_17], %23 {strides = array<i32>} : memref<1x128xf32, #tpu.memory_space<vmem>>, vector<1x128xf32>,
    } else {
    }
    return
  }
  func.func @transform_0(%arg0: i32, %arg1: i32) -> (i32, i32) {
    %c0_i32 = arith.constant 0 : i32
    %c0_i32_0 = arith.constant 0 : i32
    %c0_i32_1 = arith.constant 0 : i32
    return %c0_i32, %c0_i32_0 : i32, i32
  }
  func.func @transform_1(%arg0: i32, %arg1: i32) -> (i32, i32) {
    %c0_i32 = arith.constant 0 : i32
    return %arg1, %arg0 : i32, i32
  }
  func.func @transform_2(%arg0: i32, %arg1: i32) -> (i32, i32) {
    %c0_i32 = arith.constant 0 : i32
    %c0_i32_0 = arith.constant 0 : i32
    %c0_i32_1 = arith.constant 0 : i32
    return %c0_i32, %c0_i32_0 : i32, i32
  }
  func.func @transform_3(%arg0: i32, %arg1: i32) -> (i32, i32) {
    %c0_i32 = arith.constant 0 : i32
    %c0_i32_0 = arith.constant 0 : i32
    %c0_i32_1 = arith.constant 0 : i32
    return %c0_i32, %c0_i32_0 : i32, i32
  }
  func.func @transform_4(%arg0: i32, %arg1: i32) -> (i32, i32) {
    %c0_i32 = arith.constant 0 : i32
    %c0_i32_0 = arith.constant 0 : i32
    return %c0_i32, %arg0 : i32, i32
  }
}

module attributes {stable_mosaic.version = 11 : i64} {
  func.func @kernel(%arg0: i32, %arg1: memref<1x128xf32, #tpu.memory_space<vmem>>, %arg2: memref<128x4xf32, #tpu.memory_space<vmem>>, %arg3: memref<1x1xf32, #tpu.memory_space<vmem>>, %arg4: memref<1x4xf32, #tpu.memory_space<vmem>>, %arg5: memref<1x4xf32, #tpu.memory_space<vmem>>) attributes {dimension_semantics = [#tpu.dimension_semantics<arbitrary>], iteration_bounds = array<i64: 2>, scalar_prefetch = 0 : i64, scratch_operands = 1 : i64, tpu.core_type = #tpu.core_type<tc>, window_params = [{transform_indices = @transform_0, window_bounds = array<i64: 1, 128>}, {transform_indices = @transform_1, window_bounds = array<i64: 128, 4>}, {pipeline_mode = #tpu.pipeline_mode<synchronous>, transform_indices = @transform_2, window_bounds = array<i64: 1, 1>}, {pipeline_mode = #tpu.pipeline_mode<synchronous>, transform_indices = @transform_3, window_bounds = array<i64: 1, 4>}]} {
    %c0_i32 = arith.constant 0 : i32
    %0 = arith.cmpi eq, %arg0, %c0_i32 : i32
    %1 = arith.extui %0 : i1 to i32
    %c0_i32_0 = arith.constant 0 : i32
    %2 = arith.cmpi ne, %1, %c0_i32_0 : i32
    scf.if %2 {
      %cst_9 = arith.constant 0.000000e+00 : f32
      %12 = vector.broadcast %cst_9 : f32 to vector<1x4xf32>
      %c0_10 = arith.constant 0 : index
      %c0_11 = arith.constant 0 : index
      %13 = vector.load %arg5[%c0_10, %c0_11] : memref<1x4xf32, #tpu.memory_space<vmem>>, vector<1x4xf32>
      tpu.vector_store %arg5[%c0_10, %c0_11], %12 {strides = array<i32>} : memref<1x4xf32, #tpu.memory_space<vmem>>, vector<1x4xf32>,
    } else {
    }
    %c0 = arith.constant 0 : index
    %c0_1 = arith.constant 0 : index
    %3 = vector.load %arg5[%c0, %c0_1] : memref<1x4xf32, #tpu.memory_space<vmem>>, vector<1x4xf32>
    %c0_2 = arith.constant 0 : index
    %c0_3 = arith.constant 0 : index
    %4 = vector.load %arg1[%c0_2, %c0_3] : memref<1x128xf32, #tpu.memory_space<vmem>>, vector<1x128xf32>
    %c0_4 = arith.constant 0 : index
    %c0_5 = arith.constant 0 : index
    %5 = vector.load %arg2[%c0_4, %c0_5] : memref<128x4xf32, #tpu.memory_space<vmem>>, vector<128x4xf32>
    %cst = arith.constant dense<0.000000e+00> : vector<1x4xf32>
    %6 = tpu.matmul %4, %5, %cst {dimension_numbers = #tpu.dot_dimension_numbers<[1], [0], [0], [1], [0, 0, 1, 1], [], []>} : vector<1x128xf32>, vector<128x4xf32>, vector<1x4xf32> -> vector<1x4xf32>
    %7 = arith.addf %3, %6 : vector<1x4xf32>
    %c0_6 = arith.constant 0 : index
    %c0_7 = arith.constant 0 : index
    %8 = vector.load %arg5[%c0_6, %c0_7] : memref<1x4xf32, #tpu.memory_space<vmem>>, vector<1x4xf32>
    tpu.vector_store %arg5[%c0_6, %c0_7], %7 {strides = array<i32>} : memref<1x4xf32, #tpu.memory_space<vmem>>, vector<1x4xf32>,
    %c1_i32 = arith.constant 1 : i32
    %9 = arith.cmpi eq, %arg0, %c1_i32 : i32
    %10 = arith.extui %9 : i1 to i32
    %c0_i32_8 = arith.constant 0 : i32
    %11 = arith.cmpi ne, %10, %c0_i32_8 : i32
    scf.if %11 {
      %c0_9 = arith.constant 0 : index
      %c0_10 = arith.constant 0 : index
      %12 = vector.load %arg5[%c0_9, %c0_10] : memref<1x4xf32, #tpu.memory_space<vmem>>, vector<1x4xf32>
      %c0_11 = arith.constant 0 : index
      %c0_12 = arith.constant 0 : index
      %13 = vector.load %arg3[%c0_11, %c0_12] : memref<1x1xf32, #tpu.memory_space<vmem>>, vector<1x1xf32>
      %14 = vector.broadcast %13 : vector<1x1xf32> to vector<1x4xf32>
      %15 = arith.addf %12, %14 : vector<1x4xf32>
      %16 = arith.negf %15 : vector<1x4xf32>
      %17 = math.exp %16 : vector<1x4xf32>
      %cst_13 = arith.constant 1.000000e+00 : f32
      %18 = vector.broadcast %cst_13 : f32 to vector<1x4xf32>
      %19 = arith.addf %18, %17 : vector<1x4xf32>
      %20 = arith.divf %18, %19 : vector<1x4xf32>
      %c0_14 = arith.constant 0 : index
      %c0_15 = arith.constant 0 : index
      %21 = vector.load %arg4[%c0_14, %c0_15] : memref<1x4xf32, #tpu.memory_space<vmem>>, vector<1x4xf32>
      tpu.vector_store %arg4[%c0_14, %c0_15], %20 {strides = array<i32>} : memref<1x4xf32, #tpu.memory_space<vmem>>, vector<1x4xf32>,
    } else {
    }
    return
  }
  func.func @transform_0(%arg0: i32) -> (i32, i32) {
    %c0_i32 = arith.constant 0 : i32
    %c0_i32_0 = arith.constant 0 : i32
    return %c0_i32, %arg0 : i32, i32
  }
  func.func @transform_1(%arg0: i32) -> (i32, i32) {
    %c0_i32 = arith.constant 0 : i32
    %c0_i32_0 = arith.constant 0 : i32
    return %arg0, %c0_i32 : i32, i32
  }
  func.func @transform_2(%arg0: i32) -> (i32, i32) {
    %c0_i32 = arith.constant 0 : i32
    %c0_i32_0 = arith.constant 0 : i32
    %c0_i32_1 = arith.constant 0 : i32
    return %c0_i32, %c0_i32_0 : i32, i32
  }
  func.func @transform_3(%arg0: i32) -> (i32, i32) {
    %c0_i32 = arith.constant 0 : i32
    %c0_i32_0 = arith.constant 0 : i32
    %c0_i32_1 = arith.constant 0 : i32
    return %c0_i32, %c0_i32_0 : i32, i32
  }
}

</mosaic_0001>

<llo_original>
// kernel: gcn_forward.5
$region0: #{gcn_forward.5}
  #allocation0 [shape = 'u32[]', space=smem, size = 0x4, offset = 0x4, fixed_abs, tag = 'smem constant byte address 0x4 - core index']
  #allocation1 [shape = 'u32[144,128]{1,0:T(1,128)}', space=vmem, size = 0x12000, scoped, tag = 'internal scratch']
  #allocation2 [shape = 'f32[1,4]{1,0:T(1,128)}', space=vmem, size = 0x200, scoped, tag = 'scratch operand']
  #allocation3 [shape = 'f32[1,1]{1,0:T(1,128)S(1)}', space=vmem, size = 0x200, scoped, tag = 'scoped memory for gcn_forward.5']
  %s0 = inlined_call_operand.vmem [shape: f32[1,256], index: 0, kind: input, shape index: {}]
  %s1 = inlined_call_operand.vmem [shape: f32[256,4], index: 1, kind: input, shape index: {}]
  %s2 = inlined_call_operand.<no memory space> [shape: f32[1,1], index: 2, kind: input, shape index: {}]
  %s3 = inlined_call_operand.hbm [shape: f32[1,4], index: 3, kind: output, shape index: {}]
  %s4 = sld [smem:[#allocation0]]
  $region53: #{gcn_forward.5} parent=0
    _
  %s6 = ssub.s32 1, %s4
  %s7 = scalar_select 0, %s6, %s4
  %v8 = vstv %s2
  %9 = vst [vmem:[#allocation3] sm:$0x1] %v8
  $region1: #{gcn_forward.5} parent=0
    #allocation4 [shape = 'u8[512]{0}', space=vmem, size = 0x400, scoped, tag = 'output window, operand 0, single buffered']
    #allocation5 [shape = 's32[2]{0}', space=sflag, size = 0x8, scoped, tag = 'scoped memory for gcn_forward.5']
    %10 = vsyncpa [#allocation5], 0
    loop: start=0, step=1, limit=4
    $region2: #{gcn_forward.5} parent=1 // loop_pre_header
      _
    $region3: #{gcn_forward.5} parent=1 // loop_header
      %s12 = sphi 0, %s16
      %p13 = scmp.ge.s32.totalorder %s12, 4
      %s22 = sphi 0, %s24
      %s25 = sphi 0, %s22
      %s26 = sphi 0, %s25
      %s42 = sphi 0, %s26
      %s48 = sphi 0, %s50
      %s51 = sphi 0, %s48
      %s52 = sphi 0, %s51
      %s68 = sphi 0, %s52
      %s72 = sphi 0, %s72
      %s74 = sphi 0, %s72
      %s75 = sphi 0, %s74
      %s89 = sphi 0, %s75
      %s93 = sphi 0, %s93
      %s95 = sphi 0, %s93
      %s96 = sphi 0, %s95
      %s110 = sphi 0, %s96
    $region4: #{gcn_forward.5} parent=1 // loop_header_branch
      %15 = sbr.rel (%p13) target = $region8
    $region5: #{gcn_forward.5} parent=1 // loop_body
      %s17 = ssub.s32 %s12, 1
      %s18 = ssub.s32 %s12, 2
      %s19 = sadd.s32 %s12, 1
      %s20 = ssub.s32 %s12, %s19
      %p21 = scmp.eq.s32.totalorder %s20, 0
      %s23 = sadd.s32 %s22, 1
      %s24 = scalar_select %p21, %s22, %s23
      %p27 = pneg %p21
      %p28 = scmp.eq.s32.totalorder %s12, 1
      %p29 = por %p27, %p28
      %p30 = scmp.ne.s32.totalorder %s22, %s25
      %p31 = scmp.eq.s32.totalorder %s12, 0
      %p32 = por %p30, %p31
      %p33 = scmp.ne.s32.totalorder %s22, %s25
      %p34 = scmp.eq.s32.totalorder %s17, 1
      %p35 = por %p33, %p34
      %p36 = scmp.ne.s32.totalorder %s25, %s26
      %p37 = scmp.eq.s32.totalorder %s17, 0
      %p38 = por %p36, %p37
      %p39 = scmp.ne.s32.totalorder %s25, %s26
      %p40 = scmp.eq.s32.totalorder %s18, 1
      %p41 = por %p39, %p40
      %p43 = scmp.ne.s32.totalorder %s26, %s42
      %p44 = scmp.eq.s32.totalorder %s18, 0
      %p45 = por %p43, %p44
      %s46 = ssub.s32 %s12, %s19
      %p47 = scmp.eq.s32.totalorder %s46, 0
      %s49 = sadd.s32 %s48, 1
      %s50 = scalar_select %p47, %s48, %s49
      %p53 = pneg %p47
      %p54 = scmp.eq.s32.totalorder %s12, 1
      %p55 = por %p53, %p54
      %p56 = scmp.ne.s32.totalorder %s48, %s51
      %p57 = scmp.eq.s32.totalorder %s12, 0
      %p58 = por %p56, %p57
      %p59 = scmp.ne.s32.totalorder %s48, %s51
      %p60 = scmp.eq.s32.totalorder %s17, 1
      %p61 = por %p59, %p60
      %p62 = scmp.ne.s32.totalorder %s51, %s52
      %p63 = scmp.eq.s32.totalorder %s17, 0
      %p64 = por %p62, %p63
      %p65 = scmp.ne.s32.totalorder %s51, %s52
      %p66 = scmp.eq.s32.totalorder %s18, 1
      %p67 = por %p65, %p66
      %p69 = scmp.ne.s32.totalorder %s52, %s68
      %p70 = scmp.eq.s32.totalorder %s18, 0
      %p71 = por %p69, %p70
      %s73 = sadd.s32 %s72, 1
      %p76 = scmp.eq.s32.totalorder %s12, 1
      %p77 = scmp.ne.s32.totalorder %s72, %s74
      %p78 = scmp.eq.s32.totalorder %s12, 0
      %p79 = por %p77, %p78
      %p80 = scmp.ne.s32.totalorder %s72, %s74
      %p81 = scmp.eq.s32.totalorder %s17, 1
      %p82 = por %p80, %p81
      %p83 = scmp.ne.s32.totalorder %s74, %s75
      %p84 = scmp.eq.s32.totalorder %s17, 0
      %p85 = por %p83, %p84
      %p86 = scmp.ne.s32.totalorder %s74, %s75
      %p87 = scmp.eq.s32.totalorder %s18, 1
      %p88 = por %p86, %p87
      %p90 = scmp.ne.s32.totalorder %s75, %s89
      %p91 = scmp.eq.s32.totalorder %s18, 0
      %p92 = por %p90, %p91
      %s94 = sadd.s32 %s93, 1
      %p97 = scmp.eq.s32.totalorder %s12, 1
      %p98 = scmp.ne.s32.totalorder %s93, %s95
      %p99 = scmp.eq.s32.totalorder %s12, 0
      %p100 = por %p98, %p99
      %p101 = scmp.ne.s32.totalorder %s93, %s95
      %p102 = scmp.eq.s32.totalorder %s17, 1
      %p103 = por %p101, %p102
      %p104 = scmp.ne.s32.totalorder %s95, %s96
      %p105 = scmp.eq.s32.totalorder %s17, 0
      %p106 = por %p104, %p105
      %p107 = scmp.ne.s32.totalorder %s95, %s96
      %p108 = scmp.eq.s32.totalorder %s18, 1
      %p109 = por %p107, %p108
      %p111 = scmp.ne.s32.totalorder %s96, %s110
      %p112 = scmp.eq.s32.totalorder %s18, 0
      %p113 = por %p111, %p112
      %p114 = scmp.le.s32.totalorder 1, %s12
      %p115 = scmp.lt.s32.totalorder %s12, 3
      %p116 = pnand %p114, %p115
      %p117 = pneg %p116
      // Predicated region
      $region9: #{gcn_forward.5} parent=5 // pred_check
        _
      $region10: #{gcn_forward.5} parent=5 // pred_check_branch
        %119 = sbr.rel (%p116) target = $region12
      $region11: #{gcn_forward.5} parent=5 // pred_region
        %s120 = ssub.s32 %s12, 1
        // Predicated region
        $region13: #{gcn_forward.5} parent=11 // pred_check
          %p121 = pneg %p85
        $region14: #{gcn_forward.5} parent=11 // pred_check_branch
          %123 = sbr.rel (%p121) target = $region16
        $region15: #{gcn_forward.5} parent=11 // pred_region
          _
        $region16: #{gcn_forward.5} parent=11 // pred_fallthru
          _
      $region12: #{gcn_forward.5} parent=5 // pred_fallthru
        _
      %p124 = scmp.lt.s32.totalorder %s12, 2
      // Predicated region
      $region17: #{gcn_forward.5} parent=5 // pred_check
        %p125 = pneg %p124
      $region18: #{gcn_forward.5} parent=5 // pred_check_branch
        %127 = sbr.rel (%p125) target = $region20
      $region19: #{gcn_forward.5} parent=5 // pred_region
        // Predicated region
        $region21: #{gcn_forward.5} parent=19 // pred_check
          %p128 = pneg %p32
        $region22: #{gcn_forward.5} parent=19 // pred_check_branch
          %130 = sbr.rel (%p128) target = $region24
        $region23: #{gcn_forward.5} parent=19 // pred_region
          %p131 = scmp.lt.s32.totalorder %s12, 1
          %s132 = scalar_select %p131, %s12, 1
          %s133 = scalar_lea.vmem %s0, %s132
        $region24: #{gcn_forward.5} parent=19 // pred_fallthru
          _
        // Predicated region
        $region25: #{gcn_forward.5} parent=19 // pred_check
          %p134 = pneg %p58
        $region26: #{gcn_forward.5} parent=19 // pred_check_branch
          %136 = sbr.rel (%p134) target = $region28
        $region27: #{gcn_forward.5} parent=19 // pred_region
          %s137 = smul.u32 16, %s12
          %p138 = scmp.lt.s32.totalorder %s137, 31
          %s139 = scalar_select %p138, %s137, 31
          %s140 = smul.addr %s139, 8
          %s141 = scalar_lea.vmem %s1, %s140
          %s142 = smul.u32 16, %s12
        $region28: #{gcn_forward.5} parent=19 // pred_fallthru
          _
      $region20: #{gcn_forward.5} parent=5 // pred_fallthru
        _
      %p143 = scmp.le.s32.totalorder 1, %s12
      %p144 = scmp.lt.s32.totalorder %s12, 3
      %p145 = pnand %p143, %p144
      %p146 = pneg %p145
      // Predicated region
      $region29: #{gcn_forward.5} parent=5 // pred_check
        _
      $region30: #{gcn_forward.5} parent=5 // pred_check_branch
        %148 = sbr.rel (%p145) target = $region32
      $region31: #{gcn_forward.5} parent=5 // pred_region
        %s149 = ssub.s32 %s12, 1
        %p150 = scmp.lt.s32.totalorder %s17, 1
        %s151 = scalar_select %p150, %s17, 1
        %s152 = scalar_lea.vmem %s0, %s151
        %p153 = pneg %p38
        %p154 = pneg %p35
        %s155 = smul.u32 16, %s17
        %p156 = scmp.lt.s32.totalorder %s155, 31
        %s157 = scalar_select %p156, %s155, 31
        %s158 = smul.addr %s157, 8
        %s159 = scalar_lea.vmem %s1, %s158
        %p160 = pneg %p64
        %p161 = pneg %p61
        %p162 = pneg %p85
        %p163 = pneg %p82
        %p164 = pneg %p106
        %p165 = pneg %p103
        %p166 = scmp.lt.s32.totalorder %s17, 1
        %s167 = scalar_select %p166, %s17, 1
        %s168 = scalar_lea.vmem %s0, %s167
        %s169 = smul.u32 16, %s17
        %p170 = scmp.lt.s32.totalorder %s169, 31
        %s171 = scalar_select %p170, %s169, 31
        %s172 = smul.addr %s171, 8
        %s173 = scalar_lea.vmem %s1, %s172
        %s174 = smul.u32 16, %s17
        %p175 = scmp.eq.s32.totalorder %s17, 0
        // Predicated region
        $region33: #{gcn_forward.5} parent=31 // pred_check
          %p176 = pneg %p175
        $region34: #{gcn_forward.5} parent=31 // pred_check_branch
          %178 = sbr.rel (%p176) target = $region36
        $region35: #{gcn_forward.5} parent=31 // pred_region
          %vm179 = vcmask 24576
          %180 = vst.msk [vmem:[#allocation2] sm:$0x1] %vm179, 0.0
        $region36: #{gcn_forward.5} parent=31 // pred_fallthru
          _
        %v181 = vld [vmem:[#allocation2] sm:$0x1]
        %v182 = vld [vmem:[%s168] sm:$0x1]
        %v183 = vld [vmem:[%s173] sm:$0xff]
        %v184 = vld [vmem:[%s173 + $0x8] sm:$0xff]
        %v185 = vld [vmem:[%s173 + $0x10] sm:$0xff]
        %v186 = vld [vmem:[%s173 + $0x18] sm:$0xff]
        %v187 = vld [vmem:[%s173 + $0x20] sm:$0xff]
        %v188 = vld [vmem:[%s173 + $0x28] sm:$0xff]
        %v189 = vld [vmem:[%s173 + $0x30] sm:$0xff]
        %v190 = vld [vmem:[%s173 + $0x38] sm:$0xff]
        %v191 = vld [vmem:[%s173 + $0x40] sm:$0xff]
        %v192 = vld [vmem:[%s173 + $0x48] sm:$0xff]
        %v193 = vld [vmem:[%s173 + $0x50] sm:$0xff]
        %v194 = vld [vmem:[%s173 + $0x58] sm:$0xff]
        %v195 = vld [vmem:[%s173 + $0x60] sm:$0xff]
        %v196 = vld [vmem:[%s173 + $0x68] sm:$0xff]
        %v197 = vld [vmem:[%s173 + $0x70] sm:$0xff]
        %v198 = vld [vmem:[%s173 + $0x78] sm:$0xff]
        %199 = vmatprep.subr.mxu0 0.0
        %200 = vmatpush1.msra.mxu0 %v183
        %201 = vmatprep.subr.mxu0 0.0
        %202 = vmatpush1.msra.mxu0 %v184
        %203 = vmatprep.subr.mxu0 0.0
        %204 = vmatpush1.msra.mxu0 %v185
        %205 = vmatprep.subr.mxu0 0.0
        %206 = vmatpush1.msra.mxu0 %v186
        %207 = vmatprep.subr.mxu0 0.0
        %208 = vmatpush1.msra.mxu0 %v187
        %209 = vmatprep.subr.mxu0 0.0
        %210 = vmatpush1.msra.mxu0 %v188
        %211 = vmatprep.subr.mxu0 0.0
        %212 = vmatpush1.msra.mxu0 %v189
        %213 = vmatprep.subr.mxu0 0.0
        %214 = vmatpush1.msra.mxu0 %v190
        %215 = vmatprep.subr.mxu0 0.0
        %216 = vmatpush1.msra.mxu0 %v191
        %217 = vmatprep.subr.mxu0 0.0
        %218 = vmatpush1.msra.mxu0 %v192
        %219 = vmatprep.subr.mxu0 0.0
        %220 = vmatpush1.msra.mxu0 %v193
        %221 = vmatprep.subr.mxu0 0.0
        %222 = vmatpush1.msra.mxu0 %v194
        %223 = vmatprep.subr.mxu0 0.0
        %224 = vmatpush1.msra.mxu0 %v195
        %225 = vmatprep.subr.mxu0 0.0
        %226 = vmatpush1.msra.mxu0 %v196
        %227 = vmatprep.subr.mxu0 0.0
        %228 = vmatpush1.msra.mxu0 %v197
        %229 = vmatprep.subr.mxu0 0.0
        %230 = vmatpush1.msra.mxu0 %v198
        %231 = vmatprep.subr.mxu0 0.0
        %232 = vmatpush1.msra.mxu0 0.0
        %233 = vmatprep.subr.mxu0 0.0
        %234 = vmatpush1.msra.mxu0 0.0
        %235 = vmatprep.subr.mxu0 0.0
        %236 = vmatpush1.msra.mxu0 0.0
        %237 = vmatprep.subr.mxu0 0.0
        %238 = vmatpush1.msra.mxu0 0.0
        %239 = vmatprep.subr.mxu0 0.0
        %240 = vmatpush1.msra.mxu0 0.0
        %241 = vmatprep.subr.mxu0 0.0
        %242 = vmatpush1.msra.mxu0 0.0
        %243 = vmatprep.subr.mxu0 0.0
        %244 = vmatpush1.msra.mxu0 0.0
        %245 = vmatprep.subr.mxu0 0.0
        %246 = vmatpush1.msra.mxu0 0.0
        %247 = vmatprep.subr.mxu0 0.0
        %248 = vmatpush1.msra.mxu0 0.0
        %249 = vmatprep.subr.mxu0 0.0
        %250 = vmatpush1.msra.mxu0 0.0
        %251 = vmatprep.subr.mxu0 0.0
        %252 = vmatpush1.msra.mxu0 0.0
        %253 = vmatprep.subr.mxu0 0.0
        %254 = vmatpush1.msra.mxu0 0.0
        %255 = vmatprep.subr.mxu0 0.0
        %256 = vmatpush1.msra.mxu0 0.0
        %257 = vmatprep.subr.mxu0 0.0
        %258 = vmatpush1.msra.mxu0 0.0
        %259 = vmatprep.subr.mxu0 0.0
        %260 = vmatpush1.msra.mxu0 0.0
        %261 = vmatprep.subr.mxu0 0.0
        %262 = vmatpush1.msra.mxu0 0.0
        %263 = vmatprep.mubr.f32.mxu0 0.0
        %264 = vmatmul.mubr.f32.gmra.mrb[0].mxu0 %v182
        %v265 = vpop.f32.mrb[0].mxu0
        %v266 = vadd.f32 0.0, %v265
        %v267 = vpop.f32.mrb[0].mxu0
        %268 = vdwg.mxu0
        %v269 = vadd.f32 %v181, %v266
        %vm270 = vcmask 24576
        %271 = vst.msk [vmem:[#allocation2] sm:$0x1] %vm270, %v269
        %p272 = scmp.eq.s32.totalorder %s17, 1
        // Predicated region
        $region37: #{gcn_forward.5} parent=31 // pred_check
          %p273 = pneg %p272
        $region38: #{gcn_forward.5} parent=31 // pred_check_branch
          %275 = sbr.rel (%p273) target = $region40
        $region39: #{gcn_forward.5} parent=31 // pred_region
          %v276 = vld [vmem:[#allocation2] sm:$0x1]
          %v277 = vld [vmem:[#allocation3] sm:$0x1]
          %279 = vset.pattern.permute.xlu0 0
          %280 = vperm.xlu0 %279, %v277
          %v281 = vpop.permute.xlu0 %280
          %v283 = vlaneseq
          %v284 = vshrl.u32 %v283, 7
          %v285 = vsub.s32 0, %v284
          %v286 = vrot.slane %v281, %v285
          %v287 = vadd.f32 %v276, %v286
          %v288 = vxor.u32 %v287, 2147483648
          %v289 = vmul.f32 %v288, 1.442695
          %v290 = vpow.pop %v289
          %v291 = vadd.f32 %v290, 1.0
          %v292 = vrcp.pop %v291
          %v293 = vmul.f32 1.0, %v292
          %294 = vst.msk [vmem:[#allocation4] sm:$0x1] %vm270, %v293
        $region40: #{gcn_forward.5} parent=31 // pred_fallthru
          _
        // Predicated region
        $region41: #{gcn_forward.5} parent=31 // pred_check
          %p295 = pneg %p103
        $region42: #{gcn_forward.5} parent=31 // pred_check_branch
          %297 = sbr.rel (%p295) target = $region44
        $region43: #{gcn_forward.5} parent=31 // pred_region
          %s299 = ssub.s32 16, 16
          %300 = vsyncadd [#allocation5], %s299
          %s302 = sshll.u32 [#allocation4], 4
          %s303 = int_to_ptr.vmem [resolvable:$true] %s302
          %305 = dma.vmem_to_hbm [thread:$0]  %s303, 16, %s3, [#allocation5]
        $region44: #{gcn_forward.5} parent=31 // pred_fallthru
          _
        // Predicated region
        $region45: #{gcn_forward.5} parent=31 // pred_check
          %p306 = pneg %p103
        $region46: #{gcn_forward.5} parent=31 // pred_check_branch
          %308 = sbr.rel (%p306) target = $region48
        $region47: #{gcn_forward.5} parent=31 // pred_region
          %309 = dma.done [#allocation5], 16
        $region48: #{gcn_forward.5} parent=31 // pred_fallthru
          _
      $region32: #{gcn_forward.5} parent=5 // pred_fallthru
        _
      %p310 = scmp.le.s32.totalorder 2, %s12
      // Predicated region
      $region49: #{gcn_forward.5} parent=5 // pred_check
        %p311 = pneg %p310
      $region50: #{gcn_forward.5} parent=5 // pred_check_branch
        %313 = sbr.rel (%p311) target = $region52
      $region51: #{gcn_forward.5} parent=5 // pred_region
        %s314 = ssub.s32 %s12, 2
      $region52: #{gcn_forward.5} parent=5 // pred_fallthru
        _
    $region6: #{gcn_forward.5} parent=1 // loop_footer
      %s16 = sadd.s32 1, %s12
    $region7: #{gcn_forward.5} parent=1 // loop_footer_branch
      %11 = sbr.rel target = $region3
    $region8: #{gcn_forward.5} parent=1 // loop_exit
      _
    %315 = vsyncpa [#allocation5], 1
    %s316 = scalar_lea.sflag [#allocation5], 1
    %317 = vsyncpa %s316, 1

// kernel: gcn_forward.4
$region0: #{gcn_forward.4}
  #allocation0 [shape = 'u32[]', space=smem, size = 0x4, offset = 0x4, fixed_abs, tag = 'smem constant byte address 0x4 - core index']
  #allocation1 [shape = 'u32[144,128]{1,0:T(1,128)}', space=vmem, size = 0x12000, scoped, tag = 'internal scratch']
  #allocation2 [shape = 'f32[64,128]{1,0:T(8,128)}', space=vmem, size = 0x8000, scoped, tag = 'scratch operand']
  %s0 = inlined_call_operand.vmem [shape: bf16[64,256], index: 0, kind: input, shape index: {}]
  %s1 = inlined_call_operand.vmem [shape: bf16[256,256], index: 1, kind: input, shape index: {}]
  %s2 = inlined_call_operand.vmem [shape: f32[64,1], index: 2, kind: input, shape index: {}]
  %s3 = inlined_call_operand.vmem [shape: bf16[1,64], index: 3, kind: input, shape index: {}]
  %s4 = inlined_call_operand.vmem [shape: f32[1,256], index: 4, kind: output, shape index: {}]
  %s5 = sld [smem:[#allocation0]]
  $region98: #{gcn_forward.4} parent=0
    _
  %s7 = ssub.s32 1, %s5
  %s8 = scalar_select 0, %s7, %s5
  $region1: #{gcn_forward.4} parent=0
    #allocation3 [shape = 'u8[65536]{0}', space=vmem, size = 0x10000, scoped, tag = 'input window, operand 1']
    loop: start=0, step=1, limit=6
    $region2: #{gcn_forward.4} parent=1 // loop_pre_header
      _
    $region3: #{gcn_forward.4} parent=1 // loop_header
      %s10 = sphi 0, %s14
      %p11 = scmp.ge.s32.totalorder %s10, 6
      %s17 = sphi 0, %s29
      %s18 = sphi 0, %s25
      %s19 = sphi 0, %s17
      %s20 = sphi 0, %s18
      %s21 = sphi 0, %s19
      %s22 = sphi 0, %s20
      %s30 = sphi 0, %s30
      %s32 = sphi 0, %s30
      %s33 = sphi 0, %s32
      %s47 = sphi 0, %s33
      %s55 = sphi 0, %s57
      %s58 = sphi 0, %s55
      %s59 = sphi 0, %s58
      %s75 = sphi 0, %s59
      %s79 = sphi 0, %s79
      %s81 = sphi 0, %s79
      %s82 = sphi 0, %s81
      %s96 = sphi 0, %s82
      %s100 = sphi 0, %s100
      %s102 = sphi 0, %s100
      %s103 = sphi 0, %s102
      %s117 = sphi 0, %s103
      %s123 = sphi 0, %s125
      %s126 = sphi 0, %s123
      %s127 = sphi 0, %s126
      %s143 = sphi 0, %s127
    $region4: #{gcn_forward.4} parent=1 // loop_header_branch
      %13 = sbr.rel (%p11) target = $region8
    $region5: #{gcn_forward.4} parent=1 // loop_body
      %s15 = ssub.s32 %s10, 1
      %s16 = ssub.s32 %s10, 2
      %s23 = sadd.s32 1, %s18
      %p24 = scmp.ge.s32.totalorder %s23, 2
      %s25 = scalar_select %p24, 0, %s23
      %s26 = sadd.s32 1, %s17
      %s27 = scalar_select %p24, %s26, %s17
      %p28 = scmp.ge.s32.totalorder %s27, 2
      %s29 = scalar_select %p28, 0, %s27
      %s31 = sadd.s32 %s30, 1
      %p34 = scmp.eq.s32.totalorder %s10, 3
      %p35 = scmp.ne.s32.totalorder %s30, %s32
      %p36 = scmp.eq.s32.totalorder %s10, 0
      %p37 = por %p35, %p36
      %p38 = scmp.ne.s32.totalorder %s30, %s32
      %p39 = scmp.eq.s32.totalorder %s15, 3
      %p40 = por %p38, %p39
      %p41 = scmp.ne.s32.totalorder %s32, %s33
      %p42 = scmp.eq.s32.totalorder %s15, 0
      %p43 = por %p41, %p42
      %p44 = scmp.ne.s32.totalorder %s32, %s33
      %p45 = scmp.eq.s32.totalorder %s16, 3
      %p46 = por %p44, %p45
      %p48 = scmp.ne.s32.totalorder %s33, %s47
      %p49 = scmp.eq.s32.totalorder %s16, 0
      %p50 = por %p48, %p49
      %s51 = ssub.s32 %s18, %s25
      %s52 = ssub.s32 %s17, %s29
      %s53 = sor.u32 %s51, %s52
      %p54 = scmp.eq.s32.totalorder %s53, 0
      %s56 = sadd.s32 %s55, 1
      %s57 = scalar_select %p54, %s55, %s56
      %p60 = pneg %p54
      %p61 = scmp.eq.s32.totalorder %s10, 3
      %p62 = por %p60, %p61
      %p63 = scmp.ne.s32.totalorder %s55, %s58
      %p64 = scmp.eq.s32.totalorder %s10, 0
      %p65 = por %p63, %p64
      %p66 = scmp.ne.s32.totalorder %s55, %s58
      %p67 = scmp.eq.s32.totalorder %s15, 3
      %p68 = por %p66, %p67
      %p69 = scmp.ne.s32.totalorder %s58, %s59
      %p70 = scmp.eq.s32.totalorder %s15, 0
      %p71 = por %p69, %p70
      %p72 = scmp.ne.s32.totalorder %s58, %s59
      %p73 = scmp.eq.s32.totalorder %s16, 3
      %p74 = por %p72, %p73
      %p76 = scmp.ne.s32.totalorder %s59, %s75
      %p77 = scmp.eq.s32.totalorder %s16, 0
      %p78 = por %p76, %p77
      %s80 = sadd.s32 %s79, 1
      %p83 = scmp.eq.s32.totalorder %s10, 3
      %p84 = scmp.ne.s32.totalorder %s79, %s81
      %p85 = scmp.eq.s32.totalorder %s10, 0
      %p86 = por %p84, %p85
      %p87 = scmp.ne.s32.totalorder %s79, %s81
      %p88 = scmp.eq.s32.totalorder %s15, 3
      %p89 = por %p87, %p88
      %p90 = scmp.ne.s32.totalorder %s81, %s82
      %p91 = scmp.eq.s32.totalorder %s15, 0
      %p92 = por %p90, %p91
      %p93 = scmp.ne.s32.totalorder %s81, %s82
      %p94 = scmp.eq.s32.totalorder %s16, 3
      %p95 = por %p93, %p94
      %p97 = scmp.ne.s32.totalorder %s82, %s96
      %p98 = scmp.eq.s32.totalorder %s16, 0
      %p99 = por %p97, %p98
      %s101 = sadd.s32 %s100, 1
      %p104 = scmp.eq.s32.totalorder %s10, 3
      %p105 = scmp.ne.s32.totalorder %s100, %s102
      %p106 = scmp.eq.s32.totalorder %s10, 0
      %p107 = por %p105, %p106
      %p108 = scmp.ne.s32.totalorder %s100, %s102
      %p109 = scmp.eq.s32.totalorder %s15, 3
      %p110 = por %p108, %p109
      %p111 = scmp.ne.s32.totalorder %s102, %s103
      %p112 = scmp.eq.s32.totalorder %s15, 0
      %p113 = por %p111, %p112
      %p114 = scmp.ne.s32.totalorder %s102, %s103
      %p115 = scmp.eq.s32.totalorder %s16, 3
      %p116 = por %p114, %p115
      %p118 = scmp.ne.s32.totalorder %s103, %s117
      %p119 = scmp.eq.s32.totalorder %s16, 0
      %p120 = por %p118, %p119
      %s121 = ssub.s32 %s17, %s29
      %p122 = scmp.eq.s32.totalorder %s121, 0
      %s124 = sadd.s32 %s123, 1
      %s125 = scalar_select %p122, %s123, %s124
      %p128 = pneg %p122
      %p129 = scmp.eq.s32.totalorder %s10, 3
      %p130 = por %p128, %p129
      %p131 = scmp.ne.s32.totalorder %s123, %s126
      %p132 = scmp.eq.s32.totalorder %s10, 0
      %p133 = por %p131, %p132
      %p134 = scmp.ne.s32.totalorder %s123, %s126
      %p135 = scmp.eq.s32.totalorder %s15, 3
      %p136 = por %p134, %p135
      %p137 = scmp.ne.s32.totalorder %s126, %s127
      %p138 = scmp.eq.s32.totalorder %s15, 0
      %p139 = por %p137, %p138
      %p140 = scmp.ne.s32.totalorder %s126, %s127
      %p141 = scmp.eq.s32.totalorder %s16, 3
      %p142 = por %p140, %p141
      %p144 = scmp.ne.s32.totalorder %s127, %s143
      %p145 = scmp.eq.s32.totalorder %s16, 0
      %p146 = por %p144, %p145
      %p147 = scmp.le.s32.totalorder 1, %s10
      %p148 = scmp.lt.s32.totalorder %s10, 5
      %p149 = pnand %p147, %p148
      %p150 = pneg %p149
      // Predicated region
      $region9: #{gcn_forward.4} parent=5 // pred_check
        _
      $region10: #{gcn_forward.4} parent=5 // pred_check_branch
        %152 = sbr.rel (%p149) target = $region12
      $region11: #{gcn_forward.4} parent=5 // pred_region
        %s153 = ssub.s32 %s10, 1
        // Predicated region
        $region13: #{gcn_forward.4} parent=11 // pred_check
          %p154 = pneg %p43
        $region14: #{gcn_forward.4} parent=11 // pred_check_branch
          %156 = sbr.rel (%p154) target = $region16
        $region15: #{gcn_forward.4} parent=11 // pred_region
          _
        $region16: #{gcn_forward.4} parent=11 // pred_fallthru
          _
        // Predicated region
        $region17: #{gcn_forward.4} parent=11 // pred_check
          %p157 = pneg %p92
        $region18: #{gcn_forward.4} parent=11 // pred_check_branch
          %159 = sbr.rel (%p157) target = $region20
        $region19: #{gcn_forward.4} parent=11 // pred_region
          _
        $region20: #{gcn_forward.4} parent=11 // pred_fallthru
          _
        // Predicated region
        $region21: #{gcn_forward.4} parent=11 // pred_check
          %p160 = pneg %p113
        $region22: #{gcn_forward.4} parent=11 // pred_check_branch
          %162 = sbr.rel (%p160) target = $region24
        $region23: #{gcn_forward.4} parent=11 // pred_region
          _
        $region24: #{gcn_forward.4} parent=11 // pred_fallthru
          _
      $region12: #{gcn_forward.4} parent=5 // pred_fallthru
        _
      %p163 = scmp.lt.s32.totalorder %s10, 4
      // Predicated region
      $region25: #{gcn_forward.4} parent=5 // pred_check
        %p164 = pneg %p163
      $region26: #{gcn_forward.4} parent=5 // pred_check_branch
        %166 = sbr.rel (%p164) target = $region28
      $region27: #{gcn_forward.4} parent=5 // pred_region
        // Predicated region
        $region29: #{gcn_forward.4} parent=27 // pred_check
          %p167 = pneg %p65
        $region30: #{gcn_forward.4} parent=27 // pred_check_branch
          %169 = sbr.rel (%p167) target = $region32
        $region31: #{gcn_forward.4} parent=27 // pred_region
          %s170 = sand.u32 %s55, 1
          %s171 = sand.u32 %s55, 1
          %s172 = smul.addr %s171, 64
          %s173 = scalar_lea.vmem [#allocation3], %s172
          %s174 = smul.u32 16, %s18
          %s175 = smul.addr %s174, 2
          %s176 = sadd.s32 %s17, %s175
          %s177 = smul.addr %s176, 4
          %s178 = scalar_lea.vmem %s1, %s177
          // Predicated region
          $region33: #{gcn_forward.4} parent=31 // pred_check
            _
          $region34: #{gcn_forward.4} parent=31 // pred_check_branch
            %180 = sbr.rel (0) target = $region36
          $region35: #{gcn_forward.4} parent=31 // pred_region
            // Predicated region
            $region37: #{gcn_forward.4} parent=35 // pred_check
              _
            $region38: #{gcn_forward.4} parent=35 // pred_check_branch
              %182 = sbr.rel target = $region40
            $region39: #{gcn_forward.4} parent=35 // pred_region
              // Predicated region
              $region52: #{gcn_forward.4} parent=39 // pred_check
                _
              $region53: #{gcn_forward.4} parent=39 // pred_check_branch
                %227 = sbr.rel (0) target = $region55
              $region54: #{gcn_forward.4} parent=39 // pred_region
                loop: start=0, step=1, limit=1
                $region56: #{gcn_forward.4} parent=54 // loop_pre_header
                  _
                $region57: #{gcn_forward.4} parent=54 // loop_header
                  %s229 = sphi 0, %s233
                  %p230 = scmp.ge.s32.totalorder %s229, 1
                  %s234 = sphi %s178, %s178
                  %s235 = sphi %s173, %s173
                $region58: #{gcn_forward.4} parent=54 // loop_header_branch
                  %232 = sbr.rel (%p230) target = $region62
                $region59: #{gcn_forward.4} parent=54 // loop_body
                  _
                $region60: #{gcn_forward.4} parent=54 // loop_footer
                  %s233 = sadd.s32 1, %s229
                $region61: #{gcn_forward.4} parent=54 // loop_footer_branch
                  %228 = sbr.rel target = $region57
                $region62: #{gcn_forward.4} parent=54 // loop_exit
                  _
                loop: start=0, step=1, limit=1
                $region63: #{gcn_forward.4} parent=54 // loop_pre_header
                  _
                $region64: #{gcn_forward.4} parent=54 // loop_header
                  %s238 = sphi 0, %s242
                  %p239 = scmp.ge.s32.totalorder %s238, 1
                  %s243 = sphi %s178, %s178
                  %s244 = sphi %s173, %s173
                $region65: #{gcn_forward.4} parent=54 // loop_header_branch
                  %241 = sbr.rel (%p239) target = $region69
                $region66: #{gcn_forward.4} parent=54 // loop_body
                  %v245 = vld [vmem:[%s243] sm:$0xf]
                  %246 = vst [vmem:[%s244] sm:$0xf] %v245
                  %v247 = vld [vmem:[%s243 + $0x8] sm:$0xf]
                  %248 = vst [vmem:[%s244 + $0x4] sm:$0xf] %v247
                  %v249 = vld [vmem:[%s243 + $0x10] sm:$0xf]
                  %250 = vst [vmem:[%s244 + $0x8] sm:$0xf] %v249
                  %v251 = vld [vmem:[%s243 + $0x18] sm:$0xf]
                  %252 = vst [vmem:[%s244 + $0xc] sm:$0xf] %v251
                  %v253 = vld [vmem:[%s243 + $0x20] sm:$0xf]
                  %254 = vst [vmem:[%s244 + $0x10] sm:$0xf] %v253
                  %v255 = vld [vmem:[%s243 + $0x28] sm:$0xf]
                  %256 = vst [vmem:[%s244 + $0x14] sm:$0xf] %v255
                  %v257 = vld [vmem:[%s243 + $0x30] sm:$0xf]
                  %258 = vst [vmem:[%s244 + $0x18] sm:$0xf] %v257
                  %v259 = vld [vmem:[%s243 + $0x38] sm:$0xf]
                  %260 = vst [vmem:[%s244 + $0x1c] sm:$0xf] %v259
                  %v261 = vld [vmem:[%s243 + $0x40] sm:$0xf]
                  %262 = vst [vmem:[%s244 + $0x20] sm:$0xf] %v261
                  %v263 = vld [vmem:[%s243 + $0x48] sm:$0xf]
                  %264 = vst [vmem:[%s244 + $0x24] sm:$0xf] %v263
                  %v265 = vld [vmem:[%s243 + $0x50] sm:$0xf]
                  %266 = vst [vmem:[%s244 + $0x28] sm:$0xf] %v265
                  %v267 = vld [vmem:[%s243 + $0x58] sm:$0xf]
                  %268 = vst [vmem:[%s244 + $0x2c] sm:$0xf] %v267
                  %v269 = vld [vmem:[%s243 + $0x60] sm:$0xf]
                  %270 = vst [vmem:[%s244 + $0x30] sm:$0xf] %v269
                  %v271 = vld [vmem:[%s243 + $0x68] sm:$0xf]
                  %272 = vst [vmem:[%s244 + $0x34] sm:$0xf] %v271
                  %v273 = vld [vmem:[%s243 + $0x70] sm:$0xf]
                  %274 = vst [vmem:[%s244 + $0x38] sm:$0xf] %v273
                  %v275 = vld [vmem:[%s243 + $0x78] sm:$0xf]
                  %276 = vst [vmem:[%s244 + $0x3c] sm:$0xf] %v275
                $region67: #{gcn_forward.4} parent=54 // loop_footer
                  %s242 = sadd.s32 1, %s238
                $region68: #{gcn_forward.4} parent=54 // loop_footer_branch
                  %237 = sbr.rel target = $region64
                $region69: #{gcn_forward.4} parent=54 // loop_exit
                  _
              $region55: #{gcn_forward.4} parent=39 // pred_fallthru
                _
            $region40: #{gcn_forward.4} parent=35 // pred_fallthru
              _
            // Predicated region
            $region41: #{gcn_forward.4} parent=35 // pred_check
              _
            $region42: #{gcn_forward.4} parent=35 // pred_check_branch
              %184 = sbr.rel (0) target = $region44
            $region43: #{gcn_forward.4} parent=35 // pred_region
              loop: start=0, step=1, limit=1
              $region45: #{gcn_forward.4} parent=43 // loop_pre_header
                _
              $region46: #{gcn_forward.4} parent=43 // loop_header
                %s187 = sphi 0, %s191
                %p188 = scmp.ge.s32.totalorder %s187, 1
                %s192 = sphi %s178, %s178
                %s193 = sphi %s173, %s173
              $region47: #{gcn_forward.4} parent=43 // loop_header_branch
                %190 = sbr.rel (%p188) target = $region51
              $region48: #{gcn_forward.4} parent=43 // loop_body
                %v194 = vld [vmem:[%s192] sm:$0xf]
                %195 = vst [vmem:[%s193] sm:$0xf] %v194
                %v196 = vld [vmem:[%s192 + $0x8] sm:$0xf]
                %197 = vst [vmem:[%s193 + $0x4] sm:$0xf] %v196
                %v198 = vld [vmem:[%s192 + $0x10] sm:$0xf]
                %199 = vst [vmem:[%s193 + $0x8] sm:$0xf] %v198
                %v200 = vld [vmem:[%s192 + $0x18] sm:$0xf]
                %201 = vst [vmem:[%s193 + $0xc] sm:$0xf] %v200
                %v202 = vld [vmem:[%s192 + $0x20] sm:$0xf]
                %203 = vst [vmem:[%s193 + $0x10] sm:$0xf] %v202
                %v204 = vld [vmem:[%s192 + $0x28] sm:$0xf]
                %205 = vst [vmem:[%s193 + $0x14] sm:$0xf] %v204
                %v206 = vld [vmem:[%s192 + $0x30] sm:$0xf]
                %207 = vst [vmem:[%s193 + $0x18] sm:$0xf] %v206
                %v208 = vld [vmem:[%s192 + $0x38] sm:$0xf]
                %209 = vst [vmem:[%s193 + $0x1c] sm:$0xf] %v208
                %v210 = vld [vmem:[%s192 + $0x40] sm:$0xf]
                %211 = vst [vmem:[%s193 + $0x20] sm:$0xf] %v210
                %v212 = vld [vmem:[%s192 + $0x48] sm:$0xf]
                %213 = vst [vmem:[%s193 + $0x24] sm:$0xf] %v212
                %v214 = vld [vmem:[%s192 + $0x50] sm:$0xf]
                %215 = vst [vmem:[%s193 + $0x28] sm:$0xf] %v214
                %v216 = vld [vmem:[%s192 + $0x58] sm:$0xf]
                %217 = vst [vmem:[%s193 + $0x2c] sm:$0xf] %v216
                %v218 = vld [vmem:[%s192 + $0x60] sm:$0xf]
                %219 = vst [vmem:[%s193 + $0x30] sm:$0xf] %v218
                %v220 = vld [vmem:[%s192 + $0x68] sm:$0xf]
                %221 = vst [vmem:[%s193 + $0x34] sm:$0xf] %v220
                %v222 = vld [vmem:[%s192 + $0x70] sm:$0xf]
                %223 = vst [vmem:[%s193 + $0x38] sm:$0xf] %v222
                %v224 = vld [vmem:[%s192 + $0x78] sm:$0xf]
                %225 = vst [vmem:[%s193 + $0x3c] sm:$0xf] %v224
              $region49: #{gcn_forward.4} parent=43 // loop_footer
                %s191 = sadd.s32 1, %s187
              $region50: #{gcn_forward.4} parent=43 // loop_footer_branch
                %186 = sbr.rel target = $region46
              $region51: #{gcn_forward.4} parent=43 // loop_exit
                _
            $region44: #{gcn_forward.4} parent=35 // pred_fallthru
              _
          $region36: #{gcn_forward.4} parent=31 // pred_fallthru
            _
          %277 = vnop
        $region32: #{gcn_forward.4} parent=27 // pred_fallthru
          _
      $region28: #{gcn_forward.4} parent=5 // pred_fallthru
        _
      %p278 = scmp.le.s32.totalorder 1, %s10
      %p279 = scmp.lt.s32.totalorder %s10, 5
      %p280 = pnand %p278, %p279
      %p281 = pneg %p280
      // Predicated region
      $region70: #{gcn_forward.4} parent=5 // pred_check
        _
      $region71: #{gcn_forward.4} parent=5 // pred_check_branch
        %283 = sbr.rel (%p280) target = $region73
      $region72: #{gcn_forward.4} parent=5 // pred_region
        %s284 = ssub.s32 %s10, 1
        %s285 = sand.u32 %s58, 1
        %s286 = sand.u32 %s58, 1
        %s287 = smul.addr %s286, 64
        %s288 = scalar_lea.vmem [#allocation3], %s287
        // Predicated region
        $region74: #{gcn_forward.4} parent=72 // pred_check
          %p289 = pneg %p71
        $region75: #{gcn_forward.4} parent=72 // pred_check_branch
          %291 = sbr.rel (%p289) target = $region77
        $region76: #{gcn_forward.4} parent=72 // pred_region
          _
        $region77: #{gcn_forward.4} parent=72 // pred_fallthru
          _
        %p292 = pneg %p43
        %p293 = pneg %p40
        %s294 = sand.u32 %s58, 1
        %s295 = sand.u32 %s58, 1
        %s296 = smul.addr %s295, 64
        %s297 = scalar_lea.vmem [#allocation3], %s296
        %p298 = pneg %p71
        %p299 = pneg %p68
        %p300 = pneg %p92
        %p301 = pneg %p89
        %p302 = pneg %p113
        %p303 = pneg %p110
        %p304 = pneg %p139
        %p305 = pneg %p136
        %p306 = scmp.lt.s32.totalorder %s19, 1
        %s307 = scalar_select %p306, %s19, 1
        %s308 = scalar_lea.vmem %s4, %s307
        %s309 = smul.u32 16, %s20
        %p310 = scmp.lt.s32.totalorder %s19, 1
        %s311 = scalar_select %p310, %s19, 1
        %s312 = scalar_lea.vmem %s4, %s311
        %p314 = scmp.eq.s32.totalorder %s20, 0
        // Predicated region
        $region78: #{gcn_forward.4} parent=72 // pred_check
          %p315 = pneg %p314
        $region79: #{gcn_forward.4} parent=72 // pred_check_branch
          %317 = sbr.rel (%p315) target = $region81
        $region80: #{gcn_forward.4} parent=72 // pred_region
          %318 = vst [vmem:[#allocation2] sm:$0xff] 0.0
          %319 = vst [vmem:[#allocation2 + $0x8] sm:$0xff] 0.0
          %320 = vst [vmem:[#allocation2 + $0x10] sm:$0xff] 0.0
          %321 = vst [vmem:[#allocation2 + $0x18] sm:$0xff] 0.0
          %322 = vst [vmem:[#allocation2 + $0x20] sm:$0xff] 0.0
          %323 = vst [vmem:[#allocation2 + $0x28] sm:$0xff] 0.0
          %324 = vst [vmem:[#allocation2 + $0x30] sm:$0xff] 0.0
          %325 = vst [vmem:[#allocation2 + $0x38] sm:$0xff] 0.0
        $region81: #{gcn_forward.4} parent=72 // pred_fallthru
          _
        %s326 = smul.u32 %s20, 128
        %v327 = vld [vmem:[#allocation2] sm:$0xff]
        %v328 = vld [vmem:[#allocation2 + $0x8] sm:$0xff]
        %v329 = vld [vmem:[#allocation2 + $0x10] sm:$0xff]
        %v330 = vld [vmem:[#allocation2 + $0x18] sm:$0xff]
        %v331 = vld [vmem:[#allocation2 + $0x20] sm:$0xff]
        %v332 = vld [vmem:[#allocation2 + $0x28] sm:$0xff]
        %v333 = vld [vmem:[#allocation2 + $0x30] sm:$0xff]
        %v334 = vld [vmem:[#allocation2 + $0x38] sm:$0xff]
        %s335 = sshra.s32 %s326, 7
        %s336 = sand.u32 %s326, 127
        %s337 = smul.addr %s335, 4
        %s338 = scalar_lea.vmem %s0, %s337
        %v339 = vld [vmem:[%s338] sm:$0xf]
        %v340 = vld [vmem:[%s338 + $0x8] sm:$0xf]
        %v341 = vld [vmem:[%s338 + $0x10] sm:$0xf]
        %v342 = vld [vmem:[%s338 + $0x18] sm:$0xf]
        %v343 = vld [vmem:[%s338 + $0x20] sm:$0xf]
        %v344 = vld [vmem:[%s338 + $0x28] sm:$0xf]
        %v345 = vld [vmem:[%s338 + $0x30] sm:$0xf]
        %v346 = vld [vmem:[%s338 + $0x38] sm:$0xf]
        %v347 = vld [vmem:[%s288] sm:$0xf]
        %v348 = vld [vmem:[%s288 + $0x4] sm:$0xf]
        %v349 = vld [vmem:[%s288 + $0x8] sm:$0xf]
        %v350 = vld [vmem:[%s288 + $0xc] sm:$0xf]
        %v351 = vld [vmem:[%s288 + $0x10] sm:$0xf]
        %v352 = vld [vmem:[%s288 + $0x14] sm:$0xf]
        %v353 = vld [vmem:[%s288 + $0x18] sm:$0xf]
        %v354 = vld [vmem:[%s288 + $0x1c] sm:$0xf]
        %v355 = vld [vmem:[%s288 + $0x20] sm:$0xf]
        %v356 = vld [vmem:[%s288 + $0x24] sm:$0xf]
        %v357 = vld [vmem:[%s288 + $0x28] sm:$0xf]
        %v358 = vld [vmem:[%s288 + $0x2c] sm:$0xf]
        %v359 = vld [vmem:[%s288 + $0x30] sm:$0xf]
        %v360 = vld [vmem:[%s288 + $0x34] sm:$0xf]
        %v361 = vld [vmem:[%s288 + $0x38] sm:$0xf]
        %v362 = vld [vmem:[%s288 + $0x3c] sm:$0xf]
        %v371 = vunpack.c.l.b16 %v339
        %v372 = vunpack.c.l.b16 %v340
        %v373 = vunpack.c.l.b16 %v341
        %v374 = vunpack.c.l.b16 %v342
        %v375 = vunpack.c.l.b16 %v343
        %v376 = vunpack.c.l.b16 %v344
        %v377 = vunpack.c.l.b16 %v345
        %v378 = vunpack.c.l.b16 %v346
        %v379 = vpack.c.b16 %v372, %v371
        %v380 = vpack.c.b16 %v374, %v373
        %v381 = vpack.c.b16 %v376, %v375
        %v382 = vpack.c.b16 %v378, %v377
        %v403 = vunpack.c.l.b16 %v347
        %v404 = vunpack.c.l.b16 %v348
        %v405 = vunpack.c.l.b16 %v349
        %v406 = vunpack.c.l.b16 %v350
        %v407 = vunpack.c.l.b16 %v351
        %v408 = vunpack.c.l.b16 %v352
        %v409 = vunpack.c.l.b16 %v353
        %v410 = vunpack.c.l.b16 %v354
        %v411 = vunpack.c.l.b16 %v355
        %v412 = vunpack.c.l.b16 %v356
        %v413 = vunpack.c.l.b16 %v357
        %v414 = vunpack.c.l.b16 %v358
        %v415 = vunpack.c.l.b16 %v359
        %v416 = vunpack.c.l.b16 %v360
        %v417 = vunpack.c.l.b16 %v361
        %v418 = vunpack.c.l.b16 %v362
        %v419 = vpack.c.b16 %v404, %v403
        %v420 = vpack.c.b16 %v406, %v405
        %v421 = vpack.c.b16 %v408, %v407
        %v422 = vpack.c.b16 %v410, %v409
        %v423 = vpack.c.b16 %v412, %v411
        %v424 = vpack.c.b16 %v414, %v413
        %v425 = vpack.c.b16 %v416, %v415
        %v426 = vpack.c.b16 %v418, %v417
        %435 = vmatprep.subr.bf16.mxu0 0
        %436 = vmatpush1.bf16.msra.mxu0 %v419
        %437 = vmatprep.subr.bf16.mxu0 0
        %438 = vmatpush1.bf16.msra.mxu0 %v420
        %439 = vmatprep.subr.bf16.mxu0 0
        %440 = vmatpush1.bf16.msra.mxu0 %v421
        %441 = vmatprep.subr.bf16.mxu0 0
        %442 = vmatpush1.bf16.msra.mxu0 %v422
        %443 = vmatprep.subr.bf16.mxu0 0
        %444 = vmatpush1.bf16.msra.mxu0 %v423
        %445 = vmatprep.subr.bf16.mxu0 0
        %446 = vmatpush1.bf16.msra.mxu0 %v424
        %447 = vmatprep.subr.bf16.mxu0 0
        %448 = vmatpush1.bf16.msra.mxu0 %v425
        %449 = vmatprep.subr.bf16.mxu0 0
        %450 = vmatpush1.bf16.msra.mxu0 %v426
        %451 = vmatprep.subr.bf16.mxu0 0
        %452 = vmatpush1.bf16.msra.mxu0 0
        %453 = vmatprep.subr.bf16.mxu0 0
        %454 = vmatpush1.bf16.msra.mxu0 0
        %455 = vmatprep.subr.bf16.mxu0 0
        %456 = vmatpush1.bf16.msra.mxu0 0
        %457 = vmatprep.subr.bf16.mxu0 0
        %458 = vmatpush1.bf16.msra.mxu0 0
        %459 = vmatprep.subr.bf16.mxu0 0
        %460 = vmatpush1.bf16.msra.mxu0 0
        %461 = vmatprep.subr.bf16.mxu0 0
        %462 = vmatpush1.bf16.msra.mxu0 0
        %463 = vmatprep.subr.bf16.mxu0 0
        %464 = vmatpush1.bf16.msra.mxu0 0
        %465 = vmatprep.subr.bf16.mxu0 0
        %466 = vmatpush1.bf16.msra.mxu0 0
        %467 = vmatprep.mubr.bf16.mxu0 0
        %468 = vmatmul.mubr.bf16.gmra.mrb[0].mxu0 %v379
        %v469 = vpop.f32.mrb[0].mxu0
        %v470 = vadd.f32 0.0, %v469
        %v471 = vpop.f32.mrb[0].mxu0
        %v472 = vpop.f32.mrb[0].mxu0
        %v473 = vadd.f32 0.0, %v472
        %v474 = vpop.f32.mrb[0].mxu0
        %475 = vmatprep.mubr.bf16.mxu0 0
        %476 = vmatmul.mubr.bf16.gmra.mrb[0].mxu0 %v380
        %v477 = vpop.f32.mrb[0].mxu0
        %v478 = vadd.f32 0.0, %v477
        %v479 = vpop.f32.mrb[0].mxu0
        %v480 = vpop.f32.mrb[0].mxu0
        %v481 = vadd.f32 0.0, %v480
        %v482 = vpop.f32.mrb[0].mxu0
        %483 = vmatprep.mubr.bf16.mxu0 0
        %484 = vmatmul.mubr.bf16.gmra.mrb[0].mxu0 %v381
        %v485 = vpop.f32.mrb[0].mxu0
        %v486 = vadd.f32 0.0, %v485
        %v487 = vpop.f32.mrb[0].mxu0
        %v488 = vpop.f32.mrb[0].mxu0
        %v489 = vadd.f32 0.0, %v488
        %v490 = vpop.f32.mrb[0].mxu0
        %491 = vmatprep.mubr.bf16.mxu0 0
        %492 = vmatmul.mubr.bf16.gmra.mrb[0].mxu0 %v382
        %v493 = vpop.f32.mrb[0].mxu0
        %v494 = vadd.f32 0.0, %v493
        %v495 = vpop.f32.mrb[0].mxu0
        %v496 = vpop.f32.mrb[0].mxu0
        %v497 = vadd.f32 0.0, %v496
        %v498 = vpop.f32.mrb[0].mxu0
        %499 = vdwg.mxu0
        %v500 = vadd.f32 %v327, %v470
        %v501 = vadd.f32 %v328, %v473
        %v502 = vadd.f32 %v329, %v478
        %v503 = vadd.f32 %v330, %v481
        %v504 = vadd.f32 %v331, %v486
        %v505 = vadd.f32 %v332, %v489
        %v506 = vadd.f32 %v333, %v494
        %v507 = vadd.f32 %v334, %v497
        %508 = vst [vmem:[#allocation2] sm:$0xff] %v500
        %509 = vst [vmem:[#allocation2 + $0x8] sm:$0xff] %v501
        %510 = vst [vmem:[#allocation2 + $0x10] sm:$0xff] %v502
        %511 = vst [vmem:[#allocation2 + $0x18] sm:$0xff] %v503
        %512 = vst [vmem:[#allocation2 + $0x20] sm:$0xff] %v504
        %513 = vst [vmem:[#allocation2 + $0x28] sm:$0xff] %v505
        %514 = vst [vmem:[#allocation2 + $0x30] sm:$0xff] %v506
        %515 = vst [vmem:[#allocation2 + $0x38] sm:$0xff] %v507
        %p516 = scmp.eq.s32.totalorder %s20, 1
        // Predicated region
        $region82: #{gcn_forward.4} parent=72 // pred_check
          %p517 = pneg %p516
        $region83: #{gcn_forward.4} parent=72 // pred_check_branch
          %519 = sbr.rel (%p517) target = $region85
        $region84: #{gcn_forward.4} parent=72 // pred_region
          %v520 = vld [vmem:[#allocation2] sm:$0xff]
          %v521 = vld [vmem:[#allocation2 + $0x8] sm:$0xff]
          %v522 = vld [vmem:[#allocation2 + $0x10] sm:$0xff]
          %v523 = vld [vmem:[#allocation2 + $0x18] sm:$0xff]
          %v524 = vld [vmem:[#allocation2 + $0x20] sm:$0xff]
          %v525 = vld [vmem:[#allocation2 + $0x28] sm:$0xff]
          %v526 = vld [vmem:[#allocation2 + $0x30] sm:$0xff]
          %v527 = vld [vmem:[#allocation2 + $0x38] sm:$0xff]
          %v528 = vld [vmem:[%s2] sm:$0xff]
          %v529 = vld [vmem:[%s2 + $0x8] sm:$0xff]
          %v530 = vld [vmem:[%s2 + $0x10] sm:$0xff]
          %v531 = vld [vmem:[%s2 + $0x18] sm:$0xff]
          %v532 = vld [vmem:[%s2 + $0x20] sm:$0xff]
          %v533 = vld [vmem:[%s2 + $0x28] sm:$0xff]
          %v534 = vld [vmem:[%s2 + $0x30] sm:$0xff]
          %v535 = vld [vmem:[%s2 + $0x38] sm:$0xff]
          %537 = vset.pattern.permute.xlu0 0
          %538 = vperm.xlu0 %537, %v528
          %v539 = vpop.permute.xlu0 %538
          %542 = vset.pattern.permute.xlu0 0
          %543 = vperm.xlu0 %542, %v529
          %v544 = vpop.permute.xlu0 %543
          %547 = vset.pattern.permute.xlu0 0
          %548 = vperm.xlu0 %547, %v530
          %v549 = vpop.permute.xlu0 %548
          %552 = vset.pattern.permute.xlu0 0
          %553 = vperm.xlu0 %552, %v531
          %v554 = vpop.permute.xlu0 %553
          %557 = vset.pattern.permute.xlu0 0
          %558 = vperm.xlu0 %557, %v532
          %v559 = vpop.permute.xlu0 %558
          %562 = vset.pattern.permute.xlu0 0
          %563 = vperm.xlu0 %562, %v533
          %v564 = vpop.permute.xlu0 %563
          %567 = vset.pattern.permute.xlu0 0
          %568 = vperm.xlu0 %567, %v534
          %v569 = vpop.permute.xlu0 %568
          %572 = vset.pattern.permute.xlu0 0
          %573 = vperm.xlu0 %572, %v535
          %v574 = vpop.permute.xlu0 %573
          %v576 = vadd.f32 %v520, %v539
          %v577 = vadd.f32 %v521, %v544
          %v578 = vadd.f32 %v522, %v549
          %v579 = vadd.f32 %v523, %v554
          %v580 = vadd.f32 %v524, %v559
          %v581 = vadd.f32 %v525, %v564
          %v582 = vadd.f32 %v526, %v569
          %v583 = vadd.f32 %v527, %v574
          %v584 = vmax.f32 %v576, 0.0
          %v585 = vmax.f32 %v577, 0.0
          %v586 = vmax.f32 %v578, 0.0
          %v587 = vmax.f32 %v579, 0.0
          %v588 = vmax.f32 %v580, 0.0
          %v589 = vmax.f32 %v581, 0.0
          %v590 = vmax.f32 %v582, 0.0
          %v591 = vmax.f32 %v583, 0.0
          %v592 = vpack.c.bf16 %v585, %v584
          %v593 = vpack.c.bf16 %v587, %v586
          %v594 = vpack.c.bf16 %v589, %v588
          %v595 = vpack.c.bf16 %v591, %v590
          %v596 = vld [vmem:[%s3] sm:$0x1]
          %vm597 = vcmask 523264
          %v599 = vsel %vm597, %v596, 0
          %601 = vmatprep.subr.bf16.mxu0 0
          %602 = vmatpush1.bf16.msra.mxu0 %v592
          %603 = vmatprep.subr.bf16.mxu0 0
          %604 = vmatpush1.bf16.msra.mxu0 %v593
          %605 = vmatprep.subr.bf16.mxu0 0
          %606 = vmatpush1.bf16.msra.mxu0 %v594
          %607 = vmatprep.subr.bf16.mxu0 0
          %608 = vmatpush1.bf16.msra.mxu0 %v595
          %609 = vmatprep.subr.bf16.mxu0 0
          %610 = vmatpush1.bf16.msra.mxu0 0
          %611 = vmatprep.subr.bf16.mxu0 0
          %612 = vmatpush1.bf16.msra.mxu0 0
          %613 = vmatprep.subr.bf16.mxu0 0
          %614 = vmatpush1.bf16.msra.mxu0 0
          %615 = vmatprep.subr.bf16.mxu0 0
          %616 = vmatpush1.bf16.msra.mxu0 0
          %617 = vmatprep.subr.bf16.mxu0 0
          %618 = vmatpush1.bf16.msra.mxu0 0
          %619 = vmatprep.subr.bf16.mxu0 0
          %620 = vmatpush1.bf16.msra.mxu0 0
          %621 = vmatprep.subr.bf16.mxu0 0
          %622 = vmatpush1.bf16.msra.mxu0 0
          %623 = vmatprep.subr.bf16.mxu0 0
          %624 = vmatpush1.bf16.msra.mxu0 0
          %625 = vmatprep.subr.bf16.mxu0 0
          %626 = vmatpush1.bf16.msra.mxu0 0
          %627 = vmatprep.subr.bf16.mxu0 0
          %628 = vmatpush1.bf16.msra.mxu0 0
          %629 = vmatprep.subr.bf16.mxu0 0
          %630 = vmatpush1.bf16.msra.mxu0 0
          %631 = vmatprep.subr.bf16.mxu0 0
          %632 = vmatpush1.bf16.msra.mxu0 0
          %633 = vmatprep.mubr.bf16.mxu0 0
          %634 = vmatmul.mubr.bf16.gmra.mrb[0].mxu0 %v599
          %v635 = vpop.f32.mrb[0].mxu0
          %v636 = vadd.f32 0.0, %v635
          %v637 = vpop.f32.mrb[0].mxu0
          %v638 = vpop.f32.mrb[0].mxu0
          %v639 = vpop.f32.mrb[0].mxu0
          %640 = vdwg.mxu0
          %641 = vst [vmem:[%s312] sm:$0x1] %v636
        $region85: #{gcn_forward.4} parent=72 // pred_fallthru
          _
        %p642 = scmp.lt.s32.totalorder %s19, 1
        %s643 = scalar_select %p642, %s19, 1
        %s644 = scalar_lea.vmem %s4, %s643
        // Predicated region
        $region86: #{gcn_forward.4} parent=72 // pred_check
          %p645 = pneg %p136
        $region87: #{gcn_forward.4} parent=72 // pred_check_branch
          %647 = sbr.rel (%p645) target = $region89
        $region88: #{gcn_forward.4} parent=72 // pred_region
          _
        $region89: #{gcn_forward.4} parent=72 // pred_fallthru
          _
      $region73: #{gcn_forward.4} parent=5 // pred_fallthru
        _
      %p648 = scmp.le.s32.totalorder 2, %s10
      // Predicated region
      $region90: #{gcn_forward.4} parent=5 // pred_check
        %p649 = pneg %p648
      $region91: #{gcn_forward.4} parent=5 // pred_check_branch
        %651 = sbr.rel (%p649) target = $region93
      $region92: #{gcn_forward.4} parent=5 // pred_region
        %s652 = ssub.s32 %s10, 2
        // Predicated region
        $region94: #{gcn_forward.4} parent=92 // pred_check
          %p653 = pneg %p142
        $region95: #{gcn_forward.4} parent=92 // pred_check_branch
          %655 = sbr.rel (%p653) target = $region97
        $region96: #{gcn_forward.4} parent=92 // pred_region
          %p656 = scmp.lt.s32.totalorder %s21, 1
          %s657 = scalar_select %p656, %s21, 1
          %s658 = scalar_lea.vmem %s4, %s657
        $region97: #{gcn_forward.4} parent=92 // pred_fallthru
          _
      $region93: #{gcn_forward.4} parent=5 // pred_fallthru
        _
    $region6: #{gcn_forward.4} parent=1 // loop_footer
      %s14 = sadd.s32 1, %s10
    $region7: #{gcn_forward.4} parent=1 // loop_footer_branch
      %9 = sbr.rel target = $region3
    $region8: #{gcn_forward.4} parent=1 // loop_exit
      _

// kernel: gcn_forward.3
$region0: #{gcn_forward.3}
  #allocation0 [shape = 'u32[]', space=smem, size = 0x4, offset = 0x4, fixed_abs, tag = 'smem constant byte address 0x4 - core index']
  #allocation1 [shape = 'u32[144,128]{1,0:T(1,128)}', space=vmem, size = 0x12000, scoped, tag = 'internal scratch']
  #allocation2 [shape = 'f32[64,128]{1,0:T(8,128)}', space=vmem, size = 0x8000, scoped, tag = 'scratch operand']
  %s0 = inlined_call_operand.vmem [shape: bf16[64,16], index: 0, kind: input, shape index: {}]
  %s1 = inlined_call_operand.vmem [shape: bf16[16,256], index: 1, kind: input, shape index: {}]
  %s2 = inlined_call_operand.vmem [shape: bf16[256,256], index: 2, kind: input, shape index: {}]
  %s3 = inlined_call_operand.vmem [shape: f32[64,1], index: 3, kind: input, shape index: {}]
  %s4 = inlined_call_operand.vmem [shape: bf16[64,64], index: 4, kind: input, shape index: {}]
  %s5 = inlined_call_operand.vmem [shape: bf16[64,256], index: 5, kind: output, shape index: {}]
  %s6 = sld [smem:[#allocation0]]
  $region139: #{gcn_forward.3} parent=0
    _
  %s8 = ssub.s32 1, %s6
  %s9 = scalar_select 0, %s8, %s6
  $region1: #{gcn_forward.3} parent=0
    #allocation3 [shape = 'u8[65536]{0}', space=vmem, size = 0x10000, scoped, tag = 'input window, operand 2']
    #allocation4 [shape = 'u8[32768]{0}', space=vmem, size = 0x8000, scoped, tag = 'output window, operand 0']
    loop: start=0, step=1, limit=6
    $region2: #{gcn_forward.3} parent=1 // loop_pre_header
      _
    $region3: #{gcn_forward.3} parent=1 // loop_header
      %s11 = sphi 0, %s15
      %p12 = scmp.ge.s32.totalorder %s11, 6
      %s18 = sphi 0, %s30
      %s19 = sphi 0, %s26
      %s20 = sphi 0, %s18
      %s21 = sphi 0, %s19
      %s22 = sphi 0, %s20
      %s23 = sphi 0, %s21
      %s31 = sphi 0, %s31
      %s33 = sphi 0, %s31
      %s34 = sphi 0, %s33
      %s48 = sphi 0, %s34
      %s52 = sphi 0, %s52
      %s54 = sphi 0, %s52
      %s55 = sphi 0, %s54
      %s69 = sphi 0, %s55
      %s77 = sphi 0, %s79
      %s80 = sphi 0, %s77
      %s81 = sphi 0, %s80
      %s97 = sphi 0, %s81
      %s101 = sphi 0, %s101
      %s103 = sphi 0, %s101
      %s104 = sphi 0, %s103
      %s118 = sphi 0, %s104
      %s122 = sphi 0, %s122
      %s124 = sphi 0, %s122
      %s125 = sphi 0, %s124
      %s139 = sphi 0, %s125
      %s145 = sphi 0, %s147
      %s148 = sphi 0, %s145
      %s149 = sphi 0, %s148
      %s165 = sphi 0, %s149
    $region4: #{gcn_forward.3} parent=1 // loop_header_branch
      %14 = sbr.rel (%p12) target = $region8
    $region5: #{gcn_forward.3} parent=1 // loop_body
      %s16 = ssub.s32 %s11, 1
      %s17 = ssub.s32 %s11, 2
      %s24 = sadd.s32 1, %s19
      %p25 = scmp.ge.s32.totalorder %s24, 2
      %s26 = scalar_select %p25, 0, %s24
      %s27 = sadd.s32 1, %s18
      %s28 = scalar_select %p25, %s27, %s18
      %p29 = scmp.ge.s32.totalorder %s28, 2
      %s30 = scalar_select %p29, 0, %s28
      %s32 = sadd.s32 %s31, 1
      %p35 = scmp.eq.s32.totalorder %s11, 3
      %p36 = scmp.ne.s32.totalorder %s31, %s33
      %p37 = scmp.eq.s32.totalorder %s11, 0
      %p38 = por %p36, %p37
      %p39 = scmp.ne.s32.totalorder %s31, %s33
      %p40 = scmp.eq.s32.totalorder %s16, 3
      %p41 = por %p39, %p40
      %p42 = scmp.ne.s32.totalorder %s33, %s34
      %p43 = scmp.eq.s32.totalorder %s16, 0
      %p44 = por %p42, %p43
      %p45 = scmp.ne.s32.totalorder %s33, %s34
      %p46 = scmp.eq.s32.totalorder %s17, 3
      %p47 = por %p45, %p46
      %p49 = scmp.ne.s32.totalorder %s34, %s48
      %p50 = scmp.eq.s32.totalorder %s17, 0
      %p51 = por %p49, %p50
      %s53 = sadd.s32 %s52, 1
      %p56 = scmp.eq.s32.totalorder %s11, 3
      %p57 = scmp.ne.s32.totalorder %s52, %s54
      %p58 = scmp.eq.s32.totalorder %s11, 0
      %p59 = por %p57, %p58
      %p60 = scmp.ne.s32.totalorder %s52, %s54
      %p61 = scmp.eq.s32.totalorder %s16, 3
      %p62 = por %p60, %p61
      %p63 = scmp.ne.s32.totalorder %s54, %s55
      %p64 = scmp.eq.s32.totalorder %s16, 0
      %p65 = por %p63, %p64
      %p66 = scmp.ne.s32.totalorder %s54, %s55
      %p67 = scmp.eq.s32.totalorder %s17, 3
      %p68 = por %p66, %p67
      %p70 = scmp.ne.s32.totalorder %s55, %s69
      %p71 = scmp.eq.s32.totalorder %s17, 0
      %p72 = por %p70, %p71
      %s73 = ssub.s32 %s19, %s26
      %s74 = ssub.s32 %s18, %s30
      %s75 = sor.u32 %s73, %s74
      %p76 = scmp.eq.s32.totalorder %s75, 0
      %s78 = sadd.s32 %s77, 1
      %s79 = scalar_select %p76, %s77, %s78
      %p82 = pneg %p76
      %p83 = scmp.eq.s32.totalorder %s11, 3
      %p84 = por %p82, %p83
      %p85 = scmp.ne.s32.totalorder %s77, %s80
      %p86 = scmp.eq.s32.totalorder %s11, 0
      %p87 = por %p85, %p86
      %p88 = scmp.ne.s32.totalorder %s77, %s80
      %p89 = scmp.eq.s32.totalorder %s16, 3
      %p90 = por %p88, %p89
      %p91 = scmp.ne.s32.totalorder %s80, %s81
      %p92 = scmp.eq.s32.totalorder %s16, 0
      %p93 = por %p91, %p92
      %p94 = scmp.ne.s32.totalorder %s80, %s81
      %p95 = scmp.eq.s32.totalorder %s17, 3
      %p96 = por %p94, %p95
      %p98 = scmp.ne.s32.totalorder %s81, %s97
      %p99 = scmp.eq.s32.totalorder %s17, 0
      %p100 = por %p98, %p99
      %s102 = sadd.s32 %s101, 1
      %p105 = scmp.eq.s32.totalorder %s11, 3
      %p106 = scmp.ne.s32.totalorder %s101, %s103
      %p107 = scmp.eq.s32.totalorder %s11, 0
      %p108 = por %p106, %p107
      %p109 = scmp.ne.s32.totalorder %s101, %s103
      %p110 = scmp.eq.s32.totalorder %s16, 3
      %p111 = por %p109, %p110
      %p112 = scmp.ne.s32.totalorder %s103, %s104
      %p113 = scmp.eq.s32.totalorder %s16, 0
      %p114 = por %p112, %p113
      %p115 = scmp.ne.s32.totalorder %s103, %s104
      %p116 = scmp.eq.s32.totalorder %s17, 3
      %p117 = por %p115, %p116
      %p119 = scmp.ne.s32.totalorder %s104, %s118
      %p120 = scmp.eq.s32.totalorder %s17, 0
      %p121 = por %p119, %p120
      %s123 = sadd.s32 %s122, 1
      %p126 = scmp.eq.s32.totalorder %s11, 3
      %p127 = scmp.ne.s32.totalorder %s122, %s124
      %p128 = scmp.eq.s32.totalorder %s11, 0
      %p129 = por %p127, %p128
      %p130 = scmp.ne.s32.totalorder %s122, %s124
      %p131 = scmp.eq.s32.totalorder %s16, 3
      %p132 = por %p130, %p131
      %p133 = scmp.ne.s32.totalorder %s124, %s125
      %p134 = scmp.eq.s32.totalorder %s16, 0
      %p135 = por %p133, %p134
      %p136 = scmp.ne.s32.totalorder %s124, %s125
      %p137 = scmp.eq.s32.totalorder %s17, 3
      %p138 = por %p136, %p137
      %p140 = scmp.ne.s32.totalorder %s125, %s139
      %p141 = scmp.eq.s32.totalorder %s17, 0
      %p142 = por %p140, %p141
      %s143 = ssub.s32 %s18, %s30
      %p144 = scmp.eq.s32.totalorder %s143, 0
      %s146 = sadd.s32 %s145, 1
      %s147 = scalar_select %p144, %s145, %s146
      %p150 = pneg %p144
      %p151 = scmp.eq.s32.totalorder %s11, 3
      %p152 = por %p150, %p151
      %p153 = scmp.ne.s32.totalorder %s145, %s148
      %p154 = scmp.eq.s32.totalorder %s11, 0
      %p155 = por %p153, %p154
      %p156 = scmp.ne.s32.totalorder %s145, %s148
      %p157 = scmp.eq.s32.totalorder %s16, 3
      %p158 = por %p156, %p157
      %p159 = scmp.ne.s32.totalorder %s148, %s149
      %p160 = scmp.eq.s32.totalorder %s16, 0
      %p161 = por %p159, %p160
      %p162 = scmp.ne.s32.totalorder %s148, %s149
      %p163 = scmp.eq.s32.totalorder %s17, 3
      %p164 = por %p162, %p163
      %p166 = scmp.ne.s32.totalorder %s149, %s165
      %p167 = scmp.eq.s32.totalorder %s17, 0
      %p168 = por %p166, %p167
      %p169 = scmp.le.s32.totalorder 1, %s11
      %p170 = scmp.lt.s32.totalorder %s11, 5
      %p171 = pnand %p169, %p170
      %p172 = pneg %p171
      // Predicated region
      $region9: #{gcn_forward.3} parent=5 // pred_check
        _
      $region10: #{gcn_forward.3} parent=5 // pred_check_branch
        %174 = sbr.rel (%p171) target = $region12
      $region11: #{gcn_forward.3} parent=5 // pred_region
        %s175 = ssub.s32 %s11, 1
        // Predicated region
        $region13: #{gcn_forward.3} parent=11 // pred_check
          %p176 = pneg %p44
        $region14: #{gcn_forward.3} parent=11 // pred_check_branch
          %178 = sbr.rel (%p176) target = $region16
        $region15: #{gcn_forward.3} parent=11 // pred_region
          _
        $region16: #{gcn_forward.3} parent=11 // pred_fallthru
          _
        // Predicated region
        $region17: #{gcn_forward.3} parent=11 // pred_check
          %p179 = pneg %p65
        $region18: #{gcn_forward.3} parent=11 // pred_check_branch
          %181 = sbr.rel (%p179) target = $region20
        $region19: #{gcn_forward.3} parent=11 // pred_region
          _
        $region20: #{gcn_forward.3} parent=11 // pred_fallthru
          _
        // Predicated region
        $region21: #{gcn_forward.3} parent=11 // pred_check
          %p182 = pneg %p114
        $region22: #{gcn_forward.3} parent=11 // pred_check_branch
          %184 = sbr.rel (%p182) target = $region24
        $region23: #{gcn_forward.3} parent=11 // pred_region
          _
        $region24: #{gcn_forward.3} parent=11 // pred_fallthru
          _
        // Predicated region
        $region25: #{gcn_forward.3} parent=11 // pred_check
          %p185 = pneg %p135
        $region26: #{gcn_forward.3} parent=11 // pred_check_branch
          %187 = sbr.rel (%p185) target = $region28
        $region27: #{gcn_forward.3} parent=11 // pred_region
          _
        $region28: #{gcn_forward.3} parent=11 // pred_fallthru
          _
      $region12: #{gcn_forward.3} parent=5 // pred_fallthru
        _
      %p188 = scmp.lt.s32.totalorder %s11, 4
      // Predicated region
      $region29: #{gcn_forward.3} parent=5 // pred_check
        %p189 = pneg %p188
      $region30: #{gcn_forward.3} parent=5 // pred_check_branch
        %191 = sbr.rel (%p189) target = $region32
      $region31: #{gcn_forward.3} parent=5 // pred_region
        // Predicated region
        $region33: #{gcn_forward.3} parent=31 // pred_check
          %p192 = pneg %p87
        $region34: #{gcn_forward.3} parent=31 // pred_check_branch
          %194 = sbr.rel (%p192) target = $region36
        $region35: #{gcn_forward.3} parent=31 // pred_region
          %s195 = sand.u32 %s77, 1
          %s196 = sand.u32 %s77, 1
          %s197 = smul.addr %s196, 64
          %s198 = scalar_lea.vmem [#allocation3], %s197
          %s199 = smul.u32 16, %s19
          %s200 = smul.addr %s199, 2
          %s201 = sadd.s32 %s18, %s200
          %s202 = smul.addr %s201, 4
          %s203 = scalar_lea.vmem %s2, %s202
          // Predicated region
          $region37: #{gcn_forward.3} parent=35 // pred_check
            _
          $region38: #{gcn_forward.3} parent=35 // pred_check_branch
            %205 = sbr.rel (0) target = $region40
          $region39: #{gcn_forward.3} parent=35 // pred_region
            // Predicated region
            $region41: #{gcn_forward.3} parent=39 // pred_check
              _
            $region42: #{gcn_forward.3} parent=39 // pred_check_branch
              %207 = sbr.rel target = $region44
            $region43: #{gcn_forward.3} parent=39 // pred_region
              // Predicated region
              $region56: #{gcn_forward.3} parent=43 // pred_check
                _
              $region57: #{gcn_forward.3} parent=43 // pred_check_branch
                %252 = sbr.rel (0) target = $region59
              $region58: #{gcn_forward.3} parent=43 // pred_region
                loop: start=0, step=1, limit=1
                $region60: #{gcn_forward.3} parent=58 // loop_pre_header
                  _
                $region61: #{gcn_forward.3} parent=58 // loop_header
                  %s254 = sphi 0, %s258
                  %p255 = scmp.ge.s32.totalorder %s254, 1
                  %s259 = sphi %s203, %s203
                  %s260 = sphi %s198, %s198
                $region62: #{gcn_forward.3} parent=58 // loop_header_branch
                  %257 = sbr.rel (%p255) target = $region66
                $region63: #{gcn_forward.3} parent=58 // loop_body
                  _
                $region64: #{gcn_forward.3} parent=58 // loop_footer
                  %s258 = sadd.s32 1, %s254
                $region65: #{gcn_forward.3} parent=58 // loop_footer_branch
                  %253 = sbr.rel target = $region61
                $region66: #{gcn_forward.3} parent=58 // loop_exit
                  _
                loop: start=0, step=1, limit=1
                $region67: #{gcn_forward.3} parent=58 // loop_pre_header
                  _
                $region68: #{gcn_forward.3} parent=58 // loop_header
                  %s263 = sphi 0, %s267
                  %p264 = scmp.ge.s32.totalorder %s263, 1
                  %s268 = sphi %s203, %s203
                  %s269 = sphi %s198, %s198
                $region69: #{gcn_forward.3} parent=58 // loop_header_branch
                  %266 = sbr.rel (%p264) target = $region73
                $region70: #{gcn_forward.3} parent=58 // loop_body
                  %v270 = vld [vmem:[%s268] sm:$0xf]
                  %271 = vst [vmem:[%s269] sm:$0xf] %v270
                  %v272 = vld [vmem:[%s268 + $0x8] sm:$0xf]
                  %273 = vst [vmem:[%s269 + $0x4] sm:$0xf] %v272
                  %v274 = vld [vmem:[%s268 + $0x10] sm:$0xf]
                  %275 = vst [vmem:[%s269 + $0x8] sm:$0xf] %v274
                  %v276 = vld [vmem:[%s268 + $0x18] sm:$0xf]
                  %277 = vst [vmem:[%s269 + $0xc] sm:$0xf] %v276
                  %v278 = vld [vmem:[%s268 + $0x20] sm:$0xf]
                  %279 = vst [vmem:[%s269 + $0x10] sm:$0xf] %v278
                  %v280 = vld [vmem:[%s268 + $0x28] sm:$0xf]
                  %281 = vst [vmem:[%s269 + $0x14] sm:$0xf] %v280
                  %v282 = vld [vmem:[%s268 + $0x30] sm:$0xf]
                  %283 = vst [vmem:[%s269 + $0x18] sm:$0xf] %v282
                  %v284 = vld [vmem:[%s268 + $0x38] sm:$0xf]
                  %285 = vst [vmem:[%s269 + $0x1c] sm:$0xf] %v284
                  %v286 = vld [vmem:[%s268 + $0x40] sm:$0xf]
                  %287 = vst [vmem:[%s269 + $0x20] sm:$0xf] %v286
                  %v288 = vld [vmem:[%s268 + $0x48] sm:$0xf]
                  %289 = vst [vmem:[%s269 + $0x24] sm:$0xf] %v288
                  %v290 = vld [vmem:[%s268 + $0x50] sm:$0xf]
                  %291 = vst [vmem:[%s269 + $0x28] sm:$0xf] %v290
                  %v292 = vld [vmem:[%s268 + $0x58] sm:$0xf]
                  %293 = vst [vmem:[%s269 + $0x2c] sm:$0xf] %v292
                  %v294 = vld [vmem:[%s268 + $0x60] sm:$0xf]
                  %295 = vst [vmem:[%s269 + $0x30] sm:$0xf] %v294
                  %v296 = vld [vmem:[%s268 + $0x68] sm:$0xf]
                  %297 = vst [vmem:[%s269 + $0x34] sm:$0xf] %v296
                  %v298 = vld [vmem:[%s268 + $0x70] sm:$0xf]
                  %299 = vst [vmem:[%s269 + $0x38] sm:$0xf] %v298
                  %v300 = vld [vmem:[%s268 + $0x78] sm:$0xf]
                  %301 = vst [vmem:[%s269 + $0x3c] sm:$0xf] %v300
                $region71: #{gcn_forward.3} parent=58 // loop_footer
                  %s267 = sadd.s32 1, %s263
                $region72: #{gcn_forward.3} parent=58 // loop_footer_branch
                  %262 = sbr.rel target = $region68
                $region73: #{gcn_forward.3} parent=58 // loop_exit
                  _
              $region59: #{gcn_forward.3} parent=43 // pred_fallthru
                _
            $region44: #{gcn_forward.3} parent=39 // pred_fallthru
              _
            // Predicated region
            $region45: #{gcn_forward.3} parent=39 // pred_check
              _
            $region46: #{gcn_forward.3} parent=39 // pred_check_branch
              %209 = sbr.rel (0) target = $region48
            $region47: #{gcn_forward.3} parent=39 // pred_region
              loop: start=0, step=1, limit=1
              $region49: #{gcn_forward.3} parent=47 // loop_pre_header
                _
              $region50: #{gcn_forward.3} parent=47 // loop_header
                %s212 = sphi 0, %s216
                %p213 = scmp.ge.s32.totalorder %s212, 1
                %s217 = sphi %s203, %s203
                %s218 = sphi %s198, %s198
              $region51: #{gcn_forward.3} parent=47 // loop_header_branch
                %215 = sbr.rel (%p213) target = $region55
              $region52: #{gcn_forward.3} parent=47 // loop_body
                %v219 = vld [vmem:[%s217] sm:$0xf]
                %220 = vst [vmem:[%s218] sm:$0xf] %v219
                %v221 = vld [vmem:[%s217 + $0x8] sm:$0xf]
                %222 = vst [vmem:[%s218 + $0x4] sm:$0xf] %v221
                %v223 = vld [vmem:[%s217 + $0x10] sm:$0xf]
                %224 = vst [vmem:[%s218 + $0x8] sm:$0xf] %v223
                %v225 = vld [vmem:[%s217 + $0x18] sm:$0xf]
                %226 = vst [vmem:[%s218 + $0xc] sm:$0xf] %v225
                %v227 = vld [vmem:[%s217 + $0x20] sm:$0xf]
                %228 = vst [vmem:[%s218 + $0x10] sm:$0xf] %v227
                %v229 = vld [vmem:[%s217 + $0x28] sm:$0xf]
                %230 = vst [vmem:[%s218 + $0x14] sm:$0xf] %v229
                %v231 = vld [vmem:[%s217 + $0x30] sm:$0xf]
                %232 = vst [vmem:[%s218 + $0x18] sm:$0xf] %v231
                %v233 = vld [vmem:[%s217 + $0x38] sm:$0xf]
                %234 = vst [vmem:[%s218 + $0x1c] sm:$0xf] %v233
                %v235 = vld [vmem:[%s217 + $0x40] sm:$0xf]
                %236 = vst [vmem:[%s218 + $0x20] sm:$0xf] %v235
                %v237 = vld [vmem:[%s217 + $0x48] sm:$0xf]
                %238 = vst [vmem:[%s218 + $0x24] sm:$0xf] %v237
                %v239 = vld [vmem:[%s217 + $0x50] sm:$0xf]
                %240 = vst [vmem:[%s218 + $0x28] sm:$0xf] %v239
                %v241 = vld [vmem:[%s217 + $0x58] sm:$0xf]
                %242 = vst [vmem:[%s218 + $0x2c] sm:$0xf] %v241
                %v243 = vld [vmem:[%s217 + $0x60] sm:$0xf]
                %244 = vst [vmem:[%s218 + $0x30] sm:$0xf] %v243
                %v245 = vld [vmem:[%s217 + $0x68] sm:$0xf]
                %246 = vst [vmem:[%s218 + $0x34] sm:$0xf] %v245
                %v247 = vld [vmem:[%s217 + $0x70] sm:$0xf]
                %248 = vst [vmem:[%s218 + $0x38] sm:$0xf] %v247
                %v249 = vld [vmem:[%s217 + $0x78] sm:$0xf]
                %250 = vst [vmem:[%s218 + $0x3c] sm:$0xf] %v249
              $region53: #{gcn_forward.3} parent=47 // loop_footer
                %s216 = sadd.s32 1, %s212
              $region54: #{gcn_forward.3} parent=47 // loop_footer_branch
                %211 = sbr.rel target = $region50
              $region55: #{gcn_forward.3} parent=47 // loop_exit
                _
            $region48: #{gcn_forward.3} parent=39 // pred_fallthru
              _
          $region40: #{gcn_forward.3} parent=35 // pred_fallthru
            _
          %302 = vnop
        $region36: #{gcn_forward.3} parent=31 // pred_fallthru
          _
      $region32: #{gcn_forward.3} parent=5 // pred_fallthru
        _
      %p303 = scmp.le.s32.totalorder 1, %s11
      %p304 = scmp.lt.s32.totalorder %s11, 5
      %p305 = pnand %p303, %p304
      %p306 = pneg %p305
      // Predicated region
      $region74: #{gcn_forward.3} parent=5 // pred_check
        _
      $region75: #{gcn_forward.3} parent=5 // pred_check_branch
        %308 = sbr.rel (%p305) target = $region77
      $region76: #{gcn_forward.3} parent=5 // pred_region
        %s309 = ssub.s32 %s11, 1
        %s310 = sand.u32 %s80, 1
        %s311 = sand.u32 %s80, 1
        %s312 = smul.addr %s311, 64
        %s313 = scalar_lea.vmem [#allocation3], %s312
        // Predicated region
        $region78: #{gcn_forward.3} parent=76 // pred_check
          %p314 = pneg %p93
        $region79: #{gcn_forward.3} parent=76 // pred_check_branch
          %316 = sbr.rel (%p314) target = $region81
        $region80: #{gcn_forward.3} parent=76 // pred_region
          _
        $region81: #{gcn_forward.3} parent=76 // pred_fallthru
          _
        %p317 = pneg %p44
        %p318 = pneg %p41
        %p319 = pneg %p65
        %p320 = pneg %p62
        %s321 = sand.u32 %s80, 1
        %s322 = sand.u32 %s80, 1
        %s323 = smul.addr %s322, 64
        %s324 = scalar_lea.vmem [#allocation3], %s323
        %p325 = pneg %p93
        %p326 = pneg %p90
        %p327 = pneg %p114
        %p328 = pneg %p111
        %p329 = pneg %p135
        %p330 = pneg %p132
        %p331 = pneg %p161
        %p332 = pneg %p158
        %s333 = sand.u32 %s148, 1
        %s334 = sand.u32 %s148, 1
        %s335 = smul.addr %s334, 32
        %s336 = scalar_lea.vmem [#allocation4], %s335
        %s337 = smul.u32 16, %s21
        %p339 = scmp.eq.s32.totalorder %s21, 0
        // Predicated region
        $region82: #{gcn_forward.3} parent=76 // pred_check
          %p340 = pneg %p339
        $region83: #{gcn_forward.3} parent=76 // pred_check_branch
          %342 = sbr.rel (%p340) target = $region85
        $region84: #{gcn_forward.3} parent=76 // pred_region
          %343 = vst [vmem:[#allocation2] sm:$0xff] 0.0
          %344 = vst [vmem:[#allocation2 + $0x8] sm:$0xff] 0.0
          %345 = vst [vmem:[#allocation2 + $0x10] sm:$0xff] 0.0
          %346 = vst [vmem:[#allocation2 + $0x18] sm:$0xff] 0.0
          %347 = vst [vmem:[#allocation2 + $0x20] sm:$0xff] 0.0
          %348 = vst [vmem:[#allocation2 + $0x28] sm:$0xff] 0.0
          %349 = vst [vmem:[#allocation2 + $0x30] sm:$0xff] 0.0
          %350 = vst [vmem:[#allocation2 + $0x38] sm:$0xff] 0.0
        $region85: #{gcn_forward.3} parent=76 // pred_fallthru
          _
        %s351 = smul.u32 %s21, 128
        %v352 = vld [vmem:[%s0] sm:$0xf]
        %v353 = vld [vmem:[%s0 + $0x4] sm:$0xf]
        %v354 = vld [vmem:[%s0 + $0x8] sm:$0xf]
        %v355 = vld [vmem:[%s0 + $0xc] sm:$0xf]
        %v356 = vld [vmem:[%s0 + $0x10] sm:$0xf]
        %v357 = vld [vmem:[%s0 + $0x14] sm:$0xf]
        %v358 = vld [vmem:[%s0 + $0x18] sm:$0xf]
        %v359 = vld [vmem:[%s0 + $0x1c] sm:$0xf]
        %s360 = sshra.s32 %s351, 7
        %s361 = sand.u32 %s351, 127
        %s362 = smul.addr %s360, 4
        %s363 = scalar_lea.vmem %s1, %s362
        %v364 = vld [vmem:[%s363] sm:$0xf]
        %v365 = vld [vmem:[%s363 + $0x8] sm:$0xf]
        %v374 = vunpack.c.l.b16 %v352
        %v375 = vunpack.c.l.b16 %v353
        %v376 = vunpack.c.l.b16 %v354
        %v377 = vunpack.c.l.b16 %v355
        %v378 = vunpack.c.l.b16 %v356
        %v379 = vunpack.c.l.b16 %v357
        %v380 = vunpack.c.l.b16 %v358
        %v381 = vunpack.c.l.b16 %v359
        %v382 = vpack.c.b16 %v375, %v374
        %v383 = vpack.c.b16 %v377, %v376
        %v384 = vpack.c.b16 %v379, %v378
        %v385 = vpack.c.b16 %v381, %v380
        %v388 = vunpack.c.l.b16 %v364
        %v389 = vunpack.c.l.b16 %v365
        %v390 = vpack.c.b16 %v389, %v388
        %vm392 = vcmask 130048
        %v394 = vsel %vm392, %v382, 0
        %v397 = vsel %vm392, %v383, 0
        %v400 = vsel %vm392, %v384, 0
        %v403 = vsel %vm392, %v385, 0
        %405 = vmatprep.subr.bf16.mxu0 0
        %406 = vmatpush1.bf16.msra.mxu0 %v390
        %407 = vmatprep.subr.bf16.mxu0 0
        %408 = vmatpush1.bf16.msra.mxu0 0
        %409 = vmatprep.subr.bf16.mxu0 0
        %410 = vmatpush1.bf16.msra.mxu0 0
        %411 = vmatprep.subr.bf16.mxu0 0
        %412 = vmatpush1.bf16.msra.mxu0 0
        %413 = vmatprep.subr.bf16.mxu0 0
        %414 = vmatpush1.bf16.msra.mxu0 0
        %415 = vmatprep.subr.bf16.mxu0 0
        %416 = vmatpush1.bf16.msra.mxu0 0
        %417 = vmatprep.subr.bf16.mxu0 0
        %418 = vmatpush1.bf16.msra.mxu0 0
        %419 = vmatprep.subr.bf16.mxu0 0
        %420 = vmatpush1.bf16.msra.mxu0 0
        %421 = vmatprep.subr.bf16.mxu0 0
        %422 = vmatpush1.bf16.msra.mxu0 0
        %423 = vmatprep.subr.bf16.mxu0 0
        %424 = vmatpush1.bf16.msra.mxu0 0
        %425 = vmatprep.subr.bf16.mxu0 0
        %426 = vmatpush1.bf16.msra.mxu0 0
        %427 = vmatprep.subr.bf16.mxu0 0
        %428 = vmatpush1.bf16.msra.mxu0 0
        %429 = vmatprep.subr.bf16.mxu0 0
        %430 = vmatpush1.bf16.msra.mxu0 0
        %431 = vmatprep.subr.bf16.mxu0 0
        %432 = vmatpush1.bf16.msra.mxu0 0
        %433 = vmatprep.subr.bf16.mxu0 0
        %434 = vmatpush1.bf16.msra.mxu0 0
        %435 = vmatprep.subr.bf16.mxu0 0
        %436 = vmatpush1.bf16.msra.mxu0 0
        %437 = vmatprep.mubr.bf16.mxu0 0
        %438 = vmatmul.mubr.bf16.gmra.mrb[0].mxu0 %v394
        %v439 = vpop.f32.mrb[0].mxu0
        %v440 = vadd.f32 0.0, %v439
        %v441 = vpop.f32.mrb[0].mxu0
        %v442 = vpop.f32.mrb[0].mxu0
        %v443 = vadd.f32 0.0, %v442
        %v444 = vpop.f32.mrb[0].mxu0
        %445 = vmatprep.mubr.bf16.mxu0 0
        %446 = vmatmul.mubr.bf16.gmra.mrb[0].mxu0 %v397
        %v447 = vpop.f32.mrb[0].mxu0
        %v448 = vadd.f32 0.0, %v447
        %v449 = vpop.f32.mrb[0].mxu0
        %v450 = vpop.f32.mrb[0].mxu0
        %v451 = vadd.f32 0.0, %v450
        %v452 = vpop.f32.mrb[0].mxu0
        %453 = vmatprep.mubr.bf16.mxu0 0
        %454 = vmatmul.mubr.bf16.gmra.mrb[0].mxu0 %v400
        %v455 = vpop.f32.mrb[0].mxu0
        %v456 = vadd.f32 0.0, %v455
        %v457 = vpop.f32.mrb[0].mxu0
        %v458 = vpop.f32.mrb[0].mxu0
        %v459 = vadd.f32 0.0, %v458
        %v460 = vpop.f32.mrb[0].mxu0
        %461 = vmatprep.mubr.bf16.mxu0 0
        %462 = vmatmul.mubr.bf16.gmra.mrb[0].mxu0 %v403
        %v463 = vpop.f32.mrb[0].mxu0
        %v464 = vadd.f32 0.0, %v463
        %v465 = vpop.f32.mrb[0].mxu0
        %v466 = vpop.f32.mrb[0].mxu0
        %v467 = vadd.f32 0.0, %v466
        %v468 = vpop.f32.mrb[0].mxu0
        %469 = vdwg.mxu0
        %v470 = vpack.c.bf16 %v443, %v440
        %v471 = vpack.c.bf16 %v451, %v448
        %v472 = vpack.c.bf16 %v459, %v456
        %v473 = vpack.c.bf16 %v467, %v464
        %v474 = vld [vmem:[#allocation2] sm:$0xff]
        %v475 = vld [vmem:[#allocation2 + $0x8] sm:$0xff]
        %v476 = vld [vmem:[#allocation2 + $0x10] sm:$0xff]
        %v477 = vld [vmem:[#allocation2 + $0x18] sm:$0xff]
        %v478 = vld [vmem:[#allocation2 + $0x20] sm:$0xff]
        %v479 = vld [vmem:[#allocation2 + $0x28] sm:$0xff]
        %v480 = vld [vmem:[#allocation2 + $0x30] sm:$0xff]
        %v481 = vld [vmem:[#allocation2 + $0x38] sm:$0xff]
        %v482 = vld [vmem:[%s313] sm:$0xf]
        %v483 = vld [vmem:[%s313 + $0x4] sm:$0xf]
        %v484 = vld [vmem:[%s313 + $0x8] sm:$0xf]
        %v485 = vld [vmem:[%s313 + $0xc] sm:$0xf]
        %v486 = vld [vmem:[%s313 + $0x10] sm:$0xf]
        %v487 = vld [vmem:[%s313 + $0x14] sm:$0xf]
        %v488 = vld [vmem:[%s313 + $0x18] sm:$0xf]
        %v489 = vld [vmem:[%s313 + $0x1c] sm:$0xf]
        %v490 = vld [vmem:[%s313 + $0x20] sm:$0xf]
        %v491 = vld [vmem:[%s313 + $0x24] sm:$0xf]
        %v492 = vld [vmem:[%s313 + $0x28] sm:$0xf]
        %v493 = vld [vmem:[%s313 + $0x2c] sm:$0xf]
        %v494 = vld [vmem:[%s313 + $0x30] sm:$0xf]
        %v495 = vld [vmem:[%s313 + $0x34] sm:$0xf]
        %v496 = vld [vmem:[%s313 + $0x38] sm:$0xf]
        %v497 = vld [vmem:[%s313 + $0x3c] sm:$0xf]
        %v514 = vunpack.c.l.b16 %v482
        %v515 = vunpack.c.l.b16 %v483
        %v516 = vunpack.c.l.b16 %v484
        %v517 = vunpack.c.l.b16 %v485
        %v518 = vunpack.c.l.b16 %v486
        %v519 = vunpack.c.l.b16 %v487
        %v520 = vunpack.c.l.b16 %v488
        %v521 = vunpack.c.l.b16 %v489
        %v522 = vunpack.c.l.b16 %v490
        %v523 = vunpack.c.l.b16 %v491
        %v524 = vunpack.c.l.b16 %v492
        %v525 = vunpack.c.l.b16 %v493
        %v526 = vunpack.c.l.b16 %v494
        %v527 = vunpack.c.l.b16 %v495
        %v528 = vunpack.c.l.b16 %v496
        %v529 = vunpack.c.l.b16 %v497
        %v530 = vpack.c.b16 %v515, %v514
        %v531 = vpack.c.b16 %v517, %v516
        %v532 = vpack.c.b16 %v519, %v518
        %v533 = vpack.c.b16 %v521, %v520
        %v534 = vpack.c.b16 %v523, %v522
        %v535 = vpack.c.b16 %v525, %v524
        %v536 = vpack.c.b16 %v527, %v526
        %v537 = vpack.c.b16 %v529, %v528
        %546 = vmatprep.subr.bf16.mxu0 0
        %547 = vmatpush1.bf16.msra.mxu0 %v530
        %548 = vmatprep.subr.bf16.mxu0 0
        %549 = vmatpush1.bf16.msra.mxu0 %v531
        %550 = vmatprep.subr.bf16.mxu0 0
        %551 = vmatpush1.bf16.msra.mxu0 %v532
        %552 = vmatprep.subr.bf16.mxu0 0
        %553 = vmatpush1.bf16.msra.mxu0 %v533
        %554 = vmatprep.subr.bf16.mxu0 0
        %555 = vmatpush1.bf16.msra.mxu0 %v534
        %556 = vmatprep.subr.bf16.mxu0 0
        %557 = vmatpush1.bf16.msra.mxu0 %v535
        %558 = vmatprep.subr.bf16.mxu0 0
        %559 = vmatpush1.bf16.msra.mxu0 %v536
        %560 = vmatprep.subr.bf16.mxu0 0
        %561 = vmatpush1.bf16.msra.mxu0 %v537
        %562 = vmatprep.subr.bf16.mxu0 0
        %563 = vmatpush1.bf16.msra.mxu0 0
        %564 = vmatprep.subr.bf16.mxu0 0
        %565 = vmatpush1.bf16.msra.mxu0 0
        %566 = vmatprep.subr.bf16.mxu0 0
        %567 = vmatpush1.bf16.msra.mxu0 0
        %568 = vmatprep.subr.bf16.mxu0 0
        %569 = vmatpush1.bf16.msra.mxu0 0
        %570 = vmatprep.subr.bf16.mxu0 0
        %571 = vmatpush1.bf16.msra.mxu0 0
        %572 = vmatprep.subr.bf16.mxu0 0
        %573 = vmatpush1.bf16.msra.mxu0 0
        %574 = vmatprep.subr.bf16.mxu0 0
        %575 = vmatpush1.bf16.msra.mxu0 0
        %576 = vmatprep.subr.bf16.mxu0 0
        %577 = vmatpush1.bf16.msra.mxu0 0
        %578 = vmatprep.mubr.bf16.mxu0 0
        %579 = vmatmul.mubr.bf16.gmra.mrb[0].mxu0 %v470
        %v580 = vpop.f32.mrb[0].mxu0
        %v581 = vadd.f32 0.0, %v580
        %v582 = vpop.f32.mrb[0].mxu0
        %v583 = vpop.f32.mrb[0].mxu0
        %v584 = vadd.f32 0.0, %v583
        %v585 = vpop.f32.mrb[0].mxu0
        %586 = vmatprep.mubr.bf16.mxu0 0
        %587 = vmatmul.mubr.bf16.gmra.mrb[0].mxu0 %v471
        %v588 = vpop.f32.mrb[0].mxu0
        %v589 = vadd.f32 0.0, %v588
        %v590 = vpop.f32.mrb[0].mxu0
        %v591 = vpop.f32.mrb[0].mxu0
        %v592 = vadd.f32 0.0, %v591
        %v593 = vpop.f32.mrb[0].mxu0
        %594 = vmatprep.mubr.bf16.mxu0 0
        %595 = vmatmul.mubr.bf16.gmra.mrb[0].mxu0 %v472
        %v596 = vpop.f32.mrb[0].mxu0
        %v597 = vadd.f32 0.0, %v596
        %v598 = vpop.f32.mrb[0].mxu0
        %v599 = vpop.f32.mrb[0].mxu0
        %v600 = vadd.f32 0.0, %v599
        %v601 = vpop.f32.mrb[0].mxu0
        %602 = vmatprep.mubr.bf16.mxu0 0
        %603 = vmatmul.mubr.bf16.gmra.mrb[0].mxu0 %v473
        %v604 = vpop.f32.mrb[0].mxu0
        %v605 = vadd.f32 0.0, %v604
        %v606 = vpop.f32.mrb[0].mxu0
        %v607 = vpop.f32.mrb[0].mxu0
        %v608 = vadd.f32 0.0, %v607
        %v609 = vpop.f32.mrb[0].mxu0
        %610 = vdwg.mxu0
        %v611 = vadd.f32 %v474, %v581
        %v612 = vadd.f32 %v475, %v584
        %v613 = vadd.f32 %v476, %v589
        %v614 = vadd.f32 %v477, %v592
        %v615 = vadd.f32 %v478, %v597
        %v616 = vadd.f32 %v479, %v600
        %v617 = vadd.f32 %v480, %v605
        %v618 = vadd.f32 %v481, %v608
        %619 = vst [vmem:[#allocation2] sm:$0xff] %v611
        %620 = vst [vmem:[#allocation2 + $0x8] sm:$0xff] %v612
        %621 = vst [vmem:[#allocation2 + $0x10] sm:$0xff] %v613
        %622 = vst [vmem:[#allocation2 + $0x18] sm:$0xff] %v614
        %623 = vst [vmem:[#allocation2 + $0x20] sm:$0xff] %v615
        %624 = vst [vmem:[#allocation2 + $0x28] sm:$0xff] %v616
        %625 = vst [vmem:[#allocation2 + $0x30] sm:$0xff] %v617
        %626 = vst [vmem:[#allocation2 + $0x38] sm:$0xff] %v618
        %p627 = scmp.eq.s32.totalorder %s21, 1
        // Predicated region
        $region86: #{gcn_forward.3} parent=76 // pred_check
          %p628 = pneg %p627
        $region87: #{gcn_forward.3} parent=76 // pred_check_branch
          %630 = sbr.rel (%p628) target = $region89
        $region88: #{gcn_forward.3} parent=76 // pred_region
          %v631 = vld [vmem:[#allocation2] sm:$0xff]
          %v632 = vld [vmem:[#allocation2 + $0x8] sm:$0xff]
          %v633 = vld [vmem:[#allocation2 + $0x10] sm:$0xff]
          %v634 = vld [vmem:[#allocation2 + $0x18] sm:$0xff]
          %v635 = vld [vmem:[#allocation2 + $0x20] sm:$0xff]
          %v636 = vld [vmem:[#allocation2 + $0x28] sm:$0xff]
          %v637 = vld [vmem:[#allocation2 + $0x30] sm:$0xff]
          %v638 = vld [vmem:[#allocation2 + $0x38] sm:$0xff]
          %v639 = vld [vmem:[%s3] sm:$0xff]
          %v640 = vld [vmem:[%s3 + $0x8] sm:$0xff]
          %v641 = vld [vmem:[%s3 + $0x10] sm:$0xff]
          %v642 = vld [vmem:[%s3 + $0x18] sm:$0xff]
          %v643 = vld [vmem:[%s3 + $0x20] sm:$0xff]
          %v644 = vld [vmem:[%s3 + $0x28] sm:$0xff]
          %v645 = vld [vmem:[%s3 + $0x30] sm:$0xff]
          %v646 = vld [vmem:[%s3 + $0x38] sm:$0xff]
          %648 = vset.pattern.permute.xlu0 0
          %649 = vperm.xlu0 %648, %v639
          %v650 = vpop.permute.xlu0 %649
          %653 = vset.pattern.permute.xlu0 0
          %654 = vperm.xlu0 %653, %v640
          %v655 = vpop.permute.xlu0 %654
          %658 = vset.pattern.permute.xlu0 0
          %659 = vperm.xlu0 %658, %v641
          %v660 = vpop.permute.xlu0 %659
          %663 = vset.pattern.permute.xlu0 0
          %664 = vperm.xlu0 %663, %v642
          %v665 = vpop.permute.xlu0 %664
          %668 = vset.pattern.permute.xlu0 0
          %669 = vperm.xlu0 %668, %v643
          %v670 = vpop.permute.xlu0 %669
          %673 = vset.pattern.permute.xlu0 0
          %674 = vperm.xlu0 %673, %v644
          %v675 = vpop.permute.xlu0 %674
          %678 = vset.pattern.permute.xlu0 0
          %679 = vperm.xlu0 %678, %v645
          %v680 = vpop.permute.xlu0 %679
          %683 = vset.pattern.permute.xlu0 0
          %684 = vperm.xlu0 %683, %v646
          %v685 = vpop.permute.xlu0 %684
          %v687 = vadd.f32 %v631, %v650
          %v688 = vadd.f32 %v632, %v655
          %v689 = vadd.f32 %v633, %v660
          %v690 = vadd.f32 %v634, %v665
          %v691 = vadd.f32 %v635, %v670
          %v692 = vadd.f32 %v636, %v675
          %v693 = vadd.f32 %v637, %v680
          %v694 = vadd.f32 %v638, %v685
          %v695 = vmax.f32 %v687, 0.0
          %v696 = vmax.f32 %v688, 0.0
          %v697 = vmax.f32 %v689, 0.0
          %v698 = vmax.f32 %v690, 0.0
          %v699 = vmax.f32 %v691, 0.0
          %v700 = vmax.f32 %v692, 0.0
          %v701 = vmax.f32 %v693, 0.0
          %v702 = vmax.f32 %v694, 0.0
          %v703 = vpack.c.bf16 %v696, %v695
          %v704 = vpack.c.bf16 %v698, %v697
          %v705 = vpack.c.bf16 %v700, %v699
          %v706 = vpack.c.bf16 %v702, %v701
          %v707 = vld [vmem:[%s4] sm:$0xf]
          %v708 = vld [vmem:[%s4 + $0x4] sm:$0xf]
          %v709 = vld [vmem:[%s4 + $0x8] sm:$0xf]
          %v710 = vld [vmem:[%s4 + $0xc] sm:$0xf]
          %v711 = vld [vmem:[%s4 + $0x10] sm:$0xf]
          %v712 = vld [vmem:[%s4 + $0x14] sm:$0xf]
          %v713 = vld [vmem:[%s4 + $0x18] sm:$0xf]
          %v714 = vld [vmem:[%s4 + $0x1c] sm:$0xf]
          %v723 = vunpack.c.l.b16 %v707
          %v724 = vunpack.c.l.b16 %v708
          %v725 = vunpack.c.l.b16 %v709
          %v726 = vunpack.c.l.b16 %v710
          %v727 = vunpack.c.l.b16 %v711
          %v728 = vunpack.c.l.b16 %v712
          %v729 = vunpack.c.l.b16 %v713
          %v730 = vunpack.c.l.b16 %v714
          %v731 = vpack.c.b16 %v724, %v723
          %v732 = vpack.c.b16 %v726, %v725
          %v733 = vpack.c.b16 %v728, %v727
          %v734 = vpack.c.b16 %v730, %v729
          %vm735 = vcmask 523264
          %v737 = vsel %vm735, %v731, 0
          %v740 = vsel %vm735, %v732, 0
          %v743 = vsel %vm735, %v733, 0
          %v746 = vsel %vm735, %v734, 0
          %748 = vmatprep.subr.bf16.mxu0 0
          %749 = vmatpush1.bf16.msra.mxu0 %v703
          %750 = vmatprep.subr.bf16.mxu0 0
          %751 = vmatpush1.bf16.msra.mxu0 %v704
          %752 = vmatprep.subr.bf16.mxu0 0
          %753 = vmatpush1.bf16.msra.mxu0 %v705
          %754 = vmatprep.subr.bf16.mxu0 0
          %755 = vmatpush1.bf16.msra.mxu0 %v706
          %756 = vmatprep.subr.bf16.mxu0 0
          %757 = vmatpush1.bf16.msra.mxu0 0
          %758 = vmatprep.subr.bf16.mxu0 0
          %759 = vmatpush1.bf16.msra.mxu0 0
          %760 = vmatprep.subr.bf16.mxu0 0
          %761 = vmatpush1.bf16.msra.mxu0 0
          %762 = vmatprep.subr.bf16.mxu0 0
          %763 = vmatpush1.bf16.msra.mxu0 0
          %764 = vmatprep.subr.bf16.mxu0 0
          %765 = vmatpush1.bf16.msra.mxu0 0
          %766 = vmatprep.subr.bf16.mxu0 0
          %767 = vmatpush1.bf16.msra.mxu0 0
          %768 = vmatprep.subr.bf16.mxu0 0
          %769 = vmatpush1.bf16.msra.mxu0 0
          %770 = vmatprep.subr.bf16.mxu0 0
          %771 = vmatpush1.bf16.msra.mxu0 0
          %772 = vmatprep.subr.bf16.mxu0 0
          %773 = vmatpush1.bf16.msra.mxu0 0
          %774 = vmatprep.subr.bf16.mxu0 0
          %775 = vmatpush1.bf16.msra.mxu0 0
          %776 = vmatprep.subr.bf16.mxu0 0
          %777 = vmatpush1.bf16.msra.mxu0 0
          %778 = vmatprep.subr.bf16.mxu0 0
          %779 = vmatpush1.bf16.msra.mxu0 0
          %780 = vmatprep.mubr.bf16.mxu0 0
          %781 = vmatmul.mubr.bf16.gmra.mrb[0].mxu0 %v737
          %v782 = vpop.f32.mrb[0].mxu0
          %v783 = vadd.f32 0.0, %v782
          %v784 = vpop.f32.mrb[0].mxu0
          %v785 = vpop.f32.mrb[0].mxu0
          %v786 = vadd.f32 0.0, %v785
          %v787 = vpop.f32.mrb[0].mxu0
          %788 = vmatprep.mubr.bf16.mxu0 0
          %789 = vmatmul.mubr.bf16.gmra.mrb[0].mxu0 %v740
          %v790 = vpop.f32.mrb[0].mxu0
          %v791 = vadd.f32 0.0, %v790
          %v792 = vpop.f32.mrb[0].mxu0
          %v793 = vpop.f32.mrb[0].mxu0
          %v794 = vadd.f32 0.0, %v793
          %v795 = vpop.f32.mrb[0].mxu0
          %796 = vmatprep.mubr.bf16.mxu0 0
          %797 = vmatmul.mubr.bf16.gmra.mrb[0].mxu0 %v743
          %v798 = vpop.f32.mrb[0].mxu0
          %v799 = vadd.f32 0.0, %v798
          %v800 = vpop.f32.mrb[0].mxu0
          %v801 = vpop.f32.mrb[0].mxu0
          %v802 = vadd.f32 0.0, %v801
          %v803 = vpop.f32.mrb[0].mxu0
          %804 = vmatprep.mubr.bf16.mxu0 0
          %805 = vmatmul.mubr.bf16.gmra.mrb[0].mxu0 %v746
          %v806 = vpop.f32.mrb[0].mxu0
          %v807 = vadd.f32 0.0, %v806
          %v808 = vpop.f32.mrb[0].mxu0
          %v809 = vpop.f32.mrb[0].mxu0
          %v810 = vadd.f32 0.0, %v809
          %v811 = vpop.f32.mrb[0].mxu0
          %812 = vdwg.mxu0
          %v813 = vpack.c.bf16 %v786, %v783
          %v814 = vpack.c.bf16 %v794, %v791
          %v815 = vpack.c.bf16 %v802, %v799
          %v816 = vpack.c.bf16 %v810, %v807
          %v821 = vunpack.c.l.b16 %v813
          %v822 = vunpack.c.h.b16 %v813
          %v823 = vunpack.c.l.b16 %v814
          %v824 = vunpack.c.h.b16 %v814
          %v825 = vunpack.c.l.b16 %v815
          %v826 = vunpack.c.h.b16 %v815
          %v827 = vunpack.c.l.b16 %v816
          %v828 = vunpack.c.h.b16 %v816
          %v829 = vpack.c.b16 %v821, %v821
          %v830 = vpack.c.b16 %v822, %v822
          %v831 = vpack.c.b16 %v823, %v823
          %v832 = vpack.c.b16 %v824, %v824
          %v833 = vpack.c.b16 %v825, %v825
          %v834 = vpack.c.b16 %v826, %v826
          %v835 = vpack.c.b16 %v827, %v827
          %v836 = vpack.c.b16 %v828, %v828
          %845 = vst [vmem:[%s336] sm:$0xf] %v829
          %846 = vst [vmem:[%s336 + $0x4] sm:$0xf] %v830
          %847 = vst [vmem:[%s336 + $0x8] sm:$0xf] %v831
          %848 = vst [vmem:[%s336 + $0xc] sm:$0xf] %v832
          %849 = vst [vmem:[%s336 + $0x10] sm:$0xf] %v833
          %850 = vst [vmem:[%s336 + $0x14] sm:$0xf] %v834
          %851 = vst [vmem:[%s336 + $0x18] sm:$0xf] %v835
          %852 = vst [vmem:[%s336 + $0x1c] sm:$0xf] %v836
        $region89: #{gcn_forward.3} parent=76 // pred_fallthru
          _
        %s853 = sand.u32 %s148, 1
        %s854 = sand.u32 %s148, 1
        %s855 = smul.addr %s854, 32
        %s856 = scalar_lea.vmem [#allocation4], %s855
        // Predicated region
        $region90: #{gcn_forward.3} parent=76 // pred_check
          %p857 = pneg %p158
        $region91: #{gcn_forward.3} parent=76 // pred_check_branch
          %859 = sbr.rel (%p857) target = $region93
        $region92: #{gcn_forward.3} parent=76 // pred_region
          %s860 = smul.addr %s20, 4
          %s861 = scalar_lea.vmem %s5, %s860
          // Predicated region
          $region94: #{gcn_forward.3} parent=92 // pred_check
            _
          $region95: #{gcn_forward.3} parent=92 // pred_check_branch
            %863 = sbr.rel (0) target = $region97
          $region96: #{gcn_forward.3} parent=92 // pred_region
            // Predicated region
            $region98: #{gcn_forward.3} parent=96 // pred_check
              _
            $region99: #{gcn_forward.3} parent=96 // pred_check_branch
              %865 = sbr.rel target = $region101
            $region100: #{gcn_forward.3} parent=96 // pred_region
              // Predicated region
              $region113: #{gcn_forward.3} parent=100 // pred_check
                _
              $region114: #{gcn_forward.3} parent=100 // pred_check_branch
                %894 = sbr.rel (0) target = $region116
              $region115: #{gcn_forward.3} parent=100 // pred_region
                loop: start=0, step=1, limit=1
                $region117: #{gcn_forward.3} parent=115 // loop_pre_header
                  _
                $region118: #{gcn_forward.3} parent=115 // loop_header
                  %s896 = sphi 0, %s900
                  %p897 = scmp.ge.s32.totalorder %s896, 1
                  %s901 = sphi %s856, %s856
                  %s902 = sphi %s861, %s861
                $region119: #{gcn_forward.3} parent=115 // loop_header_branch
                  %899 = sbr.rel (%p897) target = $region123
                $region120: #{gcn_forward.3} parent=115 // loop_body
                  _
                $region121: #{gcn_forward.3} parent=115 // loop_footer
                  %s900 = sadd.s32 1, %s896
                $region122: #{gcn_forward.3} parent=115 // loop_footer_branch
                  %895 = sbr.rel target = $region118
                $region123: #{gcn_forward.3} parent=115 // loop_exit
                  _
                loop: start=0, step=1, limit=1
                $region124: #{gcn_forward.3} parent=115 // loop_pre_header
                  _
                $region125: #{gcn_forward.3} parent=115 // loop_header
                  %s905 = sphi 0, %s909
                  %p906 = scmp.ge.s32.totalorder %s905, 1
                  %s910 = sphi %s856, %s856
                  %s911 = sphi %s861, %s861
                $region126: #{gcn_forward.3} parent=115 // loop_header_branch
                  %908 = sbr.rel (%p906) target = $region130
                $region127: #{gcn_forward.3} parent=115 // loop_body
                  %v912 = vld [vmem:[%s910] sm:$0xf]
                  %913 = vst [vmem:[%s911] sm:$0xf] %v912
                  %v914 = vld [vmem:[%s910 + $0x4] sm:$0xf]
                  %915 = vst [vmem:[%s911 + $0x8] sm:$0xf] %v914
                  %v916 = vld [vmem:[%s910 + $0x8] sm:$0xf]
                  %917 = vst [vmem:[%s911 + $0x10] sm:$0xf] %v916
                  %v918 = vld [vmem:[%s910 + $0xc] sm:$0xf]
                  %919 = vst [vmem:[%s911 + $0x18] sm:$0xf] %v918
                  %v920 = vld [vmem:[%s910 + $0x10] sm:$0xf]
                  %921 = vst [vmem:[%s911 + $0x20] sm:$0xf] %v920
                  %v922 = vld [vmem:[%s910 + $0x14] sm:$0xf]
                  %923 = vst [vmem:[%s911 + $0x28] sm:$0xf] %v922
                  %v924 = vld [vmem:[%s910 + $0x18] sm:$0xf]
                  %925 = vst [vmem:[%s911 + $0x30] sm:$0xf] %v924
                  %v926 = vld [vmem:[%s910 + $0x1c] sm:$0xf]
                  %927 = vst [vmem:[%s911 + $0x38] sm:$0xf] %v926
                $region128: #{gcn_forward.3} parent=115 // loop_footer
                  %s909 = sadd.s32 1, %s905
                $region129: #{gcn_forward.3} parent=115 // loop_footer_branch
                  %904 = sbr.rel target = $region125
                $region130: #{gcn_forward.3} parent=115 // loop_exit
                  _
              $region116: #{gcn_forward.3} parent=100 // pred_fallthru
                _
            $region101: #{gcn_forward.3} parent=96 // pred_fallthru
              _
            // Predicated region
            $region102: #{gcn_forward.3} parent=96 // pred_check
              _
            $region103: #{gcn_forward.3} parent=96 // pred_check_branch
              %867 = sbr.rel (0) target = $region105
            $region104: #{gcn_forward.3} parent=96 // pred_region
              loop: start=0, step=1, limit=1
              $region106: #{gcn_forward.3} parent=104 // loop_pre_header
                _
              $region107: #{gcn_forward.3} parent=104 // loop_header
                %s870 = sphi 0, %s874
                %p871 = scmp.ge.s32.totalorder %s870, 1
                %s875 = sphi %s856, %s856
                %s876 = sphi %s861, %s861
              $region108: #{gcn_forward.3} parent=104 // loop_header_branch
                %873 = sbr.rel (%p871) target = $region112
              $region109: #{gcn_forward.3} parent=104 // loop_body
                %v877 = vld [vmem:[%s875] sm:$0xf]
                %878 = vst [vmem:[%s876] sm:$0xf] %v877
                %v879 = vld [vmem:[%s875 + $0x4] sm:$0xf]
                %880 = vst [vmem:[%s876 + $0x8] sm:$0xf] %v879
                %v881 = vld [vmem:[%s875 + $0x8] sm:$0xf]
                %882 = vst [vmem:[%s876 + $0x10] sm:$0xf] %v881
                %v883 = vld [vmem:[%s875 + $0xc] sm:$0xf]
                %884 = vst [vmem:[%s876 + $0x18] sm:$0xf] %v883
                %v885 = vld [vmem:[%s875 + $0x10] sm:$0xf]
                %886 = vst [vmem:[%s876 + $0x20] sm:$0xf] %v885
                %v887 = vld [vmem:[%s875 + $0x14] sm:$0xf]
                %888 = vst [vmem:[%s876 + $0x28] sm:$0xf] %v887
                %v889 = vld [vmem:[%s875 + $0x18] sm:$0xf]
                %890 = vst [vmem:[%s876 + $0x30] sm:$0xf] %v889
                %v891 = vld [vmem:[%s875 + $0x1c] sm:$0xf]
                %892 = vst [vmem:[%s876 + $0x38] sm:$0xf] %v891
              $region110: #{gcn_forward.3} parent=104 // loop_footer
                %s874 = sadd.s32 1, %s870
              $region111: #{gcn_forward.3} parent=104 // loop_footer_branch
                %869 = sbr.rel target = $region107
              $region112: #{gcn_forward.3} parent=104 // loop_exit
                _
            $region105: #{gcn_forward.3} parent=96 // pred_fallthru
              _
          $region97: #{gcn_forward.3} parent=92 // pred_fallthru
            _
          %928 = vnop
        $region93: #{gcn_forward.3} parent=76 // pred_fallthru
          _
      $region77: #{gcn_forward.3} parent=5 // pred_fallthru
        _
      %p929 = scmp.le.s32.totalorder 2, %s11
      // Predicated region
      $region131: #{gcn_forward.3} parent=5 // pred_check
        %p930 = pneg %p929
      $region132: #{gcn_forward.3} parent=5 // pred_check_branch
        %932 = sbr.rel (%p930) target = $region134
      $region133: #{gcn_forward.3} parent=5 // pred_region
        %s933 = ssub.s32 %s11, 2
        // Predicated region
        $region135: #{gcn_forward.3} parent=133 // pred_check
          %p934 = pneg %p164
        $region136: #{gcn_forward.3} parent=133 // pred_check_branch
          %936 = sbr.rel (%p934) target = $region138
        $region137: #{gcn_forward.3} parent=133 // pred_region
          %s937 = sand.u32 %s149, 1
          %s938 = sand.u32 %s149, 1
          %s939 = smul.addr %s938, 32
          %s940 = scalar_lea.vmem [#allocation4], %s939
        $region138: #{gcn_forward.3} parent=133 // pred_fallthru
          _
      $region134: #{gcn_forward.3} parent=5 // pred_fallthru
        _
    $region6: #{gcn_forward.3} parent=1 // loop_footer
      %s15 = sadd.s32 1, %s11
    $region7: #{gcn_forward.3} parent=1 // loop_footer_branch
      %10 = sbr.rel target = $region3
    $region8: #{gcn_forward.3} parent=1 // loop_exit
      _

</llo_original>
